<compile_context>
chip_gen: v6e
topology: v6e:2x2x1
jax: 0.10.0
libtpu: 0.0.40
codegen_flags: <defaults>
</compile_context>

<pallas_src>
import jax
import jax.numpy as jnp
from jax import lax
from jax.experimental import pallas as pl
from jax.experimental.pallas import tpu as pltpu

NPART = 9          # partition = 9 branch of the module
KSIZE = 3


# ----------------------------- Pallas kernel ------------------------------ #
def _make_kernel(C, COUT):
    inv_c = 1.0 / float(C)

    def kernel(xc_ref, xres_ref, w_ref, b_ref, mask_ref, out_ref, pmean_ref):
        xc = xc_ref[0]                                         # (9*CIN, TN) bf16

        # Fused 3x3 conv: one MXU matmul, K = 9*CIN (bf16 operands, f32 accumulate).
        p = jnp.dot(w_ref[...], xc, preferred_element_type=jnp.float32)   # (COUT, TN)
        p = jnp.maximum(p + b_ref[...], 0.0)                   # bias + ReLU (f32 VPU)

        mask = mask_ref[0]                                     # (9, TN)

        terms = []
        means = []
        for pidx in range(NPART):
            ps = p[pidx * C:(pidx + 1) * C, :]                 # (C, TN) static slice
            terms.append(ps * mask[pidx:pidx + 1, :])          # VPU broadcast mul
            means.append(jnp.sum(ps, axis=0, keepdims=True))   # XLU sublane reduce (1, TN)

        # Pairwise tree: short dependency chain so the VPU adds pack under the MXU matmul.
        while len(terms) > 1:
            nxt = [terms[i] + terms[i + 1] for i in range(0, len(terms) - 1, 2)]
            if len(terms) & 1:
                nxt.append(terms[-1])
            terms = nxt

        out_ref[0] = xres_ref[0] + terms[0]                    # out = x + fused (exact f32 residual)
        pmean_ref[0] = jnp.concatenate(means, axis=0) * inv_c  # (9, TN) per-partition channel mean

    return kernel


# --------------------------- plain-JAX glue -------------------------------- #
def _roi_align_avg(x_nchw, boxes, out_size=3, spatial_scale=1.0 / 16.0):
    # TODO(synk): the original RoIAlignAvg (roi_align to (n+1)x(n+1) then 2x2 avg-pool)
    # is approximated by bilinear sampling at the centres of an out_size x out_size grid.
    B, C, H, W = x_nchw.shape

    def one(box):
        bidx = box[0].astype(jnp.int32)
        x1 = box[1] * spatial_scale
        y1 = box[2] * spatial_scale
        x2 = box[3] * spatial_scale
        y2 = box[4] * spatial_scale
        roi_w = jnp.maximum(x2 - x1, 1.0)
        roi_h = jnp.maximum(y2 - y1, 1.0)
        ys = y1 + (jnp.arange(out_size, dtype=jnp.float32) + 0.5) * (roi_h / out_size)
        xs = x1 + (jnp.arange(out_size, dtype=jnp.float32) + 0.5) * (roi_w / out_size)
        feat = x_nchw[bidx]                                 # (C, H, W)
        yq = jnp.clip(ys, 0.0, H - 1.0)
        xq = jnp.clip(xs, 0.0, W - 1.0)
        y0 = jnp.floor(yq).astype(jnp.int32)
        x0 = jnp.floor(xq).astype(jnp.int32)
        y1i = jnp.minimum(y0 + 1, H - 1)
        x1i = jnp.minimum(x0 + 1, W - 1)
        wy = (yq - y0.astype(jnp.float32))[:, None]
        wx = (xq - x0.astype(jnp.float32))[None, :]
        g = lambda yi, xi: feat[:, yi[:, None], xi[None, :]]   # (C, 3, 3)
        return (g(y0, x0) * (1 - wy) * (1 - wx) + g(y0, x1i) * (1 - wy) * wx
                + g(y1i, x0) * wy * (1 - wx) + g(y1i, x1i) * wy * wx)

    return jax.vmap(one)(boxes)


def _human_vec(params, x, human_box):
    roi = _roi_align_avg(x, human_box)                      # (B, C, 3, 3)
    # RoIConv: 3x3 valid conv on a 3x3 map == a single dot product (tiny glue)
    return jnp.einsum('bcij,ocij->bo', roi, params['w_roi']) + params['b_roi']


# ------------------------------ forward ------------------------------------ #
def partition_aware_forward(params, x, human_box, partition_mask):
    B, C, H, W = x.shape
    human_dim = C // 2
    cin = C + human_dim
    cout = C * NPART
    kcin = KSIZE * KSIZE * cin
    HW = H * W

    hvec = _human_vec(params, x, human_box)                 # (B, human_dim) f32

    # Channel concat (NCHW throughout). Staged in bf16: the conv matmul consumes bf16 operands
    # anyway, and this halves the im2col staging HBM write + kernel read.
    cat = jnp.concatenate(
        [x, jnp.broadcast_to(hvec[:, :, None, None], (B, human_dim, H, W))], axis=1)
    cat_pad = jnp.pad(cat.astype(jnp.bfloat16), ((0, 0), (0, 0), (1, 1), (1, 1)))

    # im2col staging copy on the contraction axis: (B, 9*cin, H*W) bf16, tap order (dy, dx).
    # TODO(synk): for very mem-bound shapes this could be replaced by in-kernel im2col from a
    # (cin, TH+2, W) halo tile (manual DMA) so only cin rows cross HBM instead of 9*cin.
    cols = [cat_pad[:, :, dy:dy + H, dx:dx + W].reshape(B, cin, HW)
            for dy in range(KSIZE) for dx in range(KSIZE)]
    x_cols = jnp.concatenate(cols, axis=1)                  # (B, 9*cin, HW) bf16
    x_res = x.reshape(B, C, HW)                             # exact f32 residual path

    # Weights OIHW -> (COUT, 9*cin) matching the im2col row order; bf16 for the MXU.
    w_flat = jnp.transpose(params['w_group'], (0, 2, 3, 1)).reshape(cout, kcin)
    w_flat = w_flat.astype(jnp.bfloat16)
    b_col = params['b_group'].reshape(cout, 1)

    mask_flat = partition_mask.reshape(B, NPART, HW)        # (B, 9, HW) f32

    # ---- generation-aware VMEM budget and lane-tile (TN) selection -------------------------
    try:
        vmem_cap = pltpu.get_tpu_info().vmem_capacity_bytes   # 128 MiB v5e/v6e, 64 MiB v7x
    except Exception:
        vmem_cap = 64 << 20                                    # conservative (v7x) fallback
    budget = int(vmem_cap * 0.85)

    def vmem_need(tn):
        per_step = (kcin * tn * 2        # bf16 im2col tile
                    + C * tn * 4         # f32 residual tile
                    + NPART * tn * 4     # mask tile
                    + C * tn * 4         # out tile
                    + NPART * tn * 4)    # p_mean tile
        resident = cout * kcin * 2 + cout * 4   # single-buffered weight + bias
        return 2 * per_step + resident + (2 << 20)   # x2 for double-buffered pipelined blocks

    hw_pad128 = max(128, -(-HW // 128) * 128)
    TN = 128
    for cand in (2048, 1024, 512, 256, 128):
        if cand <= hw_pad128 and vmem_need(cand) <= budget:
            TN = cand
            break
    # TODO(synk): if even TN=128 exceeds the budget (very large C on v7x), add a partition/COUT
    # grid axis with an "arbitrary" fused-accumulator so only a weight slice is resident.
    HW_pad = -(-HW // TN) * TN

    if HW_pad != HW:   # pad the lane axis so every store is a full 128-lane multiple
        pad = ((0, 0), (0, 0), (0, HW_pad - HW))
        x_cols = jnp.pad(x_cols, pad)
        x_res = jnp.pad(x_res, pad)
        mask_flat = jnp.pad(mask_flat, pad)

    kernel = _make_kernel(C, cout)

    flops = 2 * B * HW_pad * kcin * cout + 4 * B * HW_pad * cout
    bytes_accessed = (x_cols.size * 2 + x_res.size * 4 + mask_flat.size * 4 +
                      w_flat.size * 2 + b_col.size * 4 +
                      B * HW_pad * C * 4 + B * HW_pad * NPART * 4)
    vmem_limit = int(min(budget, max(vmem_need(TN) + (4 << 20), 32 << 20)))

    def build(single_buffer_invariants):
        # Grid-invariant operands (constant index_map) only need one buffer in VMEM.
        pm = dict(pipeline_mode=pl.Buffered(1)) if single_buffer_invariants else {}
        grid_spec = pltpu.PrefetchScalarGridSpec(
            num_scalar_prefetch=0,
            grid=(B, HW_pad // TN),
            in_specs=[
                pl.BlockSpec((1, kcin, TN), lambda b, t: (b, 0, t)),    # bf16 im2col tile
                pl.BlockSpec((1, C, TN), lambda b, t: (b, 0, t)),       # f32 residual tile
                pl.BlockSpec((cout, kcin), lambda b, t: (0, 0), **pm),  # conv weight (resident)
                pl.BlockSpec((cout, 1), lambda b, t: (0, 0), **pm),     # bias (resident)
                pl.BlockSpec((1, NPART, TN), lambda b, t: (b, 0, t)),   # partition mask tile
            ],
            out_specs=[
                pl.BlockSpec((1, C, TN), lambda b, t: (b, 0, t)),
                pl.BlockSpec((1, NPART, TN), lambda b, t: (b, 0, t)),
            ],
        )
        return pl.pallas_call(
            kernel,
            out_shape=(jax.ShapeDtypeStruct((B, C, HW_pad), jnp.float32),
                       jax.ShapeDtypeStruct((B, NPART, HW_pad), jnp.float32)),
            grid_spec=grid_spec,
            compiler_params=pltpu.CompilerParams(
                dimension_semantics=("parallel", "parallel"),  # batch & HW tiles independent
                vmem_limit_bytes=vmem_limit),
            cost_estimate=pl.CostEstimate(flops=int(flops), transcendentals=0,
                                          bytes_accessed=int(bytes_accessed)),
        )

    try:
        out_flat, pmean_flat = build(True)(x_cols, x_res, w_flat, b_col, mask_flat)
    except Exception:
        # Fallback for jax builds where pipeline_mode / Buffered(1) is unavailable.
        out_flat, pmean_flat = build(False)(x_cols, x_res, w_flat, b_col, mask_flat)

    out = out_flat[:, :, :HW].reshape(B, C, H, W)
    p_mean = pmean_flat[:, :, :HW].reshape(B, NPART, H, W)
    return out, p_mean


# ------------------------- reference (pure JAX) ----------------------------- #
def _reference_forward(params, x, human_box, partition_mask):
    B, C, H, W = x.shape
    human_dim = C // 2
    hvec = _human_vec(params, x, human_box)
    cat = jnp.concatenate(
        [x, jnp.broadcast_to(hvec[:, :, None, None], (B, human_dim, H, W))], axis=1)
    p_conv = lax.conv_general_dilated(
        cat, params['w_group'], (1, 1), 'SAME',
        dimension_numbers=('NCHW', 'OIHW', 'NCHW'),
        precision=lax.Precision.HIGHEST)
    p_conv = jax.nn.relu(p_conv + params['b_group'][None, :, None, None])
    p_feat = p_conv.reshape(B, NPART, C, H, W)
    p_mean = p_feat.mean(axis=2)
    fused = (p_feat * partition_mask[:, :, None]).sum(axis=1)
    return x + fused, p_mean


# ------------------------------ params -------------------------------------- #
def init_params(key, in_dim):
    human_dim = in_dim // 2
    cin = in_dim + human_dim
    cout = in_dim * NPART
    k1, k2, k3, k4 = jax.random.split(key, 4)
    return {
        'w_group': jax.random.normal(k1, (cout, cin, 3, 3), jnp.float32) * 0.05,
        'b_group': jax.random.normal(k2, (cout,), jnp.float32) * 0.05,
        'w_roi':   jax.random.normal(k3, (human_dim, in_dim, 3, 3), jnp.float32) * 0.05,
        'b_roi':   jax.random.normal(k4, (human_dim,), jnp.float32) * 0.05,
    }


if __name__ == "__main__":
    B, C, H, W = 2, 4, 16, 16           # in_dim = 4, human_dim = 2, cout = 36
    key = jax.random.PRNGKey(0)
    kx, kp = jax.random.split(key, 2)

    params = init_params(jax.random.PRNGKey(42), C)
    x = jax.random.normal(kx, (B, C, H, W), jnp.float32)
    partition_mask = jax.nn.softmax(
        jax.random.normal(kp, (B, NPART, H, W), jnp.float32), axis=1)
    # rois: [batch_idx, x1, y1, x2, y2] in original-image coords (spatial_scale = 1/16)
    human_box = jnp.array([[0., 40., 48., 200., 210.],
                           [1., 16., 24., 120., 180.]], jnp.float32)

    out, p_mean = partition_aware_forward(params, x, human_box, partition_mask)
    jax.block_until_ready((out, p_mean))

    out_ref, p_mean_ref = _reference_forward(params, x, human_box, partition_mask)
    assert out.shape == (B, C, H, W) and p_mean.shape == (B, NPART, H, W)
    # Conv matmul runs with bf16 operands (f32 accumulation); residual path stays exact f32.
    assert jnp.allclose(out, out_ref, atol=2e-2, rtol=2e-2)
    assert jnp.allclose(p_mean, p_mean_ref, atol=2e-2, rtol=2e-2)

    print("KERNEL_OK")
</pallas_src>

<mosaic_0001>
module attributes {stable_mosaic.version = 11 : i64} {
  func.func @kernel(%arg0: i32, %arg1: i32, %arg2: memref<1x54x256xbf16, #tpu.memory_space<vmem>>, %arg3: memref<1x4x256xf32, #tpu.memory_space<vmem>>, %arg4: memref<36x54xbf16, #tpu.memory_space<vmem>>, %arg5: memref<36x1xf32, #tpu.memory_space<vmem>>, %arg6: memref<1x9x256xf32, #tpu.memory_space<vmem>>, %arg7: memref<1x4x256xf32, #tpu.memory_space<vmem>>, %arg8: memref<1x9x256xf32, #tpu.memory_space<vmem>>) attributes {dimension_semantics = [#tpu.dimension_semantics<parallel>, #tpu.dimension_semantics<parallel>], iteration_bounds = array<i64: 2, 1>, scalar_prefetch = 0 : i64, scratch_operands = 0 : i64, tpu.core_type = #tpu.core_type<tc>, window_params = [{transform_indices = @transform_0, window_bounds = array<i64: 1, 54, 256>}, {transform_indices = @transform_1, window_bounds = array<i64: 1, 4, 256>}, {pipeline_mode = #tpu.pipeline_mode<synchronous>, transform_indices = @transform_2, window_bounds = array<i64: 36, 54>}, {pipeline_mode = #tpu.pipeline_mode<synchronous>, transform_indices = @transform_3, window_bounds = array<i64: 36, 1>}, {transform_indices = @transform_4, window_bounds = array<i64: 1, 9, 256>}, {transform_indices = @transform_5, window_bounds = array<i64: 1, 4, 256>}, {transform_indices = @transform_6, window_bounds = array<i64: 1, 9, 256>}]} {
    %c0 = arith.constant 0 : index
    %c0_0 = arith.constant 0 : index
    %c0_1 = arith.constant 0 : index
    %0 = vector.load %arg2[%c0, %c0_0, %c0_1] : memref<1x54x256xbf16, #tpu.memory_space<vmem>>, vector<1x54x256xbf16>
    %1 = vector.shape_cast %0 : vector<1x54x256xbf16> to vector<54x256xbf16>
    %c0_2 = arith.constant 0 : index
    %c0_3 = arith.constant 0 : index
    %2 = vector.load %arg4[%c0_2, %c0_3] : memref<36x54xbf16, #tpu.memory_space<vmem>>, vector<36x54xbf16>
    %cst = arith.constant dense<0.000000e+00> : vector<36x256xf32>
    %3 = tpu.matmul %2, %1, %cst {dimension_numbers = #tpu.dot_dimension_numbers<[1], [0], [0], [1], [0, 0, 1, 1], [], []>} : vector<36x54xbf16>, vector<54x256xbf16>, vector<36x256xf32> -> vector<36x256xf32>
    %c0_4 = arith.constant 0 : index
    %c0_5 = arith.constant 0 : index
    %4 = vector.load %arg5[%c0_4, %c0_5] : memref<36x1xf32, #tpu.memory_space<vmem>>, vector<36x1xf32>
    %5 = vector.broadcast %4 : vector<36x1xf32> to vector<36x256xf32>
    %6 = arith.addf %3, %5 : vector<36x256xf32>
    %cst_6 = arith.constant 0.000000e+00 : f32
    %7 = vector.broadcast %cst_6 : f32 to vector<36x256xf32>
    %8 = arith.maximumf %6, %7 : vector<36x256xf32>
    %c0_7 = arith.constant 0 : index
    %c0_8 = arith.constant 0 : index
    %c0_9 = arith.constant 0 : index
    %9 = vector.load %arg6[%c0_7, %c0_8, %c0_9] : memref<1x9x256xf32, #tpu.memory_space<vmem>>, vector<1x9x256xf32>
    %10 = vector.shape_cast %9 : vector<1x9x256xf32> to vector<9x256xf32>
    %11 = vector.extract_strided_slice %8 {offsets = [0, 0], sizes = [4, 256], strides = [1, 1]} : vector<36x256xf32> to vector<4x256xf32>
    %12 = vector.extract_strided_slice %10 {offsets = [0, 0], sizes = [1, 256], strides = [1, 1]} : vector<9x256xf32> to vector<1x256xf32>
    %13 = vector.broadcast %12 : vector<1x256xf32> to vector<4x256xf32>
    %14 = arith.mulf %11, %13 : vector<4x256xf32>
    %cst_10 = arith.constant dense<0.000000e+00> : vector<256xf32>
    %15 = vector.multi_reduction <add>, %11, %cst_10 [0] : vector<4x256xf32> to vector<256xf32>
    %16 = vector.shape_cast %15 : vector<256xf32> to vector<1x256xf32>
    %17 = vector.extract_strided_slice %8 {offsets = [4, 0], sizes = [4, 256], strides = [1, 1]} : vector<36x256xf32> to vector<4x256xf32>
    %18 = vector.extract_strided_slice %10 {offsets = [1, 0], sizes = [1, 256], strides = [1, 1]} : vector<9x256xf32> to vector<1x256xf32>
    %19 = vector.broadcast %18 : vector<1x256xf32> to vector<4x256xf32>
    %20 = arith.mulf %17, %19 : vector<4x256xf32>
    %cst_11 = arith.constant dense<0.000000e+00> : vector<256xf32>
    %21 = vector.multi_reduction <add>, %17, %cst_11 [0] : vector<4x256xf32> to vector<256xf32>
    %22 = vector.shape_cast %21 : vector<256xf32> to vector<1x256xf32>
    %23 = vector.extract_strided_slice %8 {offsets = [8, 0], sizes = [4, 256], strides = [1, 1]} : vector<36x256xf32> to vector<4x256xf32>
    %24 = vector.extract_strided_slice %10 {offsets = [2, 0], sizes = [1, 256], strides = [1, 1]} : vector<9x256xf32> to vector<1x256xf32>
    %25 = vector.broadcast %24 : vector<1x256xf32> to vector<4x256xf32>
    %26 = arith.mulf %23, %25 : vector<4x256xf32>
    %cst_12 = arith.constant dense<0.000000e+00> : vector<256xf32>
    %27 = vector.multi_reduction <add>, %23, %cst_12 [0] : vector<4x256xf32> to vector<256xf32>
    %28 = vector.shape_cast %27 : vector<256xf32> to vector<1x256xf32>
    %29 = vector.extract_strided_slice %8 {offsets = [12, 0], sizes = [4, 256], strides = [1, 1]} : vector<36x256xf32> to vector<4x256xf32>
    %30 = vector.extract_strided_slice %10 {offsets = [3, 0], sizes = [1, 256], strides = [1, 1]} : vector<9x256xf32> to vector<1x256xf32>
    %31 = vector.broadcast %30 : vector<1x256xf32> to vector<4x256xf32>
    %32 = arith.mulf %29, %31 : vector<4x256xf32>
    %cst_13 = arith.constant dense<0.000000e+00> : vector<256xf32>
    %33 = vector.multi_reduction <add>, %29, %cst_13 [0] : vector<4x256xf32> to vector<256xf32>
    %34 = vector.shape_cast %33 : vector<256xf32> to vector<1x256xf32>
    %35 = vector.extract_strided_slice %8 {offsets = [16, 0], sizes = [4, 256], strides = [1, 1]} : vector<36x256xf32> to vector<4x256xf32>
    %36 = vector.extract_strided_slice %10 {offsets = [4, 0], sizes = [1, 256], strides = [1, 1]} : vector<9x256xf32> to vector<1x256xf32>
    %37 = vector.broadcast %36 : vector<1x256xf32> to vector<4x256xf32>
    %38 = arith.mulf %35, %37 : vector<4x256xf32>
    %cst_14 = arith.constant dense<0.000000e+00> : vector<256xf32>
    %39 = vector.multi_reduction <add>, %35, %cst_14 [0] : vector<4x256xf32> to vector<256xf32>
    %40 = vector.shape_cast %39 : vector<256xf32> to vector<1x256xf32>
    %41 = vector.extract_strided_slice %8 {offsets = [20, 0], sizes = [4, 256], strides = [1, 1]} : vector<36x256xf32> to vector<4x256xf32>
    %42 = vector.extract_strided_slice %10 {offsets = [5, 0], sizes = [1, 256], strides = [1, 1]} : vector<9x256xf32> to vector<1x256xf32>
    %43 = vector.broadcast %42 : vector<1x256xf32> to vector<4x256xf32>
    %44 = arith.mulf %41, %43 : vector<4x256xf32>
    %cst_15 = arith.constant dense<0.000000e+00> : vector<256xf32>
    %45 = vector.multi_reduction <add>, %41, %cst_15 [0] : vector<4x256xf32> to vector<256xf32>
    %46 = vector.shape_cast %45 : vector<256xf32> to vector<1x256xf32>
    %47 = vector.extract_strided_slice %8 {offsets = [24, 0], sizes = [4, 256], strides = [1, 1]} : vector<36x256xf32> to vector<4x256xf32>
    %48 = vector.extract_strided_slice %10 {offsets = [6, 0], sizes = [1, 256], strides = [1, 1]} : vector<9x256xf32> to vector<1x256xf32>
    %49 = vector.broadcast %48 : vector<1x256xf32> to vector<4x256xf32>
    %50 = arith.mulf %47, %49 : vector<4x256xf32>
    %cst_16 = arith.constant dense<0.000000e+00> : vector<256xf32>
    %51 = vector.multi_reduction <add>, %47, %cst_16 [0] : vector<4x256xf32> to vector<256xf32>
    %52 = vector.shape_cast %51 : vector<256xf32> to vector<1x256xf32>
    %53 = vector.extract_strided_slice %8 {offsets = [28, 0], sizes = [4, 256], strides = [1, 1]} : vector<36x256xf32> to vector<4x256xf32>
    %54 = vector.extract_strided_slice %10 {offsets = [7, 0], sizes = [1, 256], strides = [1, 1]} : vector<9x256xf32> to vector<1x256xf32>
    %55 = vector.broadcast %54 : vector<1x256xf32> to vector<4x256xf32>
    %56 = arith.mulf %53, %55 : vector<4x256xf32>
    %cst_17 = arith.constant dense<0.000000e+00> : vector<256xf32>
    %57 = vector.multi_reduction <add>, %53, %cst_17 [0] : vector<4x256xf32> to vector<256xf32>
    %58 = vector.shape_cast %57 : vector<256xf32> to vector<1x256xf32>
    %59 = vector.extract_strided_slice %8 {offsets = [32, 0], sizes = [4, 256], strides = [1, 1]} : vector<36x256xf32> to vector<4x256xf32>
    %60 = vector.extract_strided_slice %10 {offsets = [8, 0], sizes = [1, 256], strides = [1, 1]} : vector<9x256xf32> to vector<1x256xf32>
    %61 = vector.broadcast %60 : vector<1x256xf32> to vector<4x256xf32>
    %62 = arith.mulf %59, %61 : vector<4x256xf32>
    %cst_18 = arith.constant dense<0.000000e+00> : vector<256xf32>
    %63 = vector.multi_reduction <add>, %59, %cst_18 [0] : vector<4x256xf32> to vector<256xf32>
    %64 = vector.shape_cast %63 : vector<256xf32> to vector<1x256xf32>
    %65 = arith.addf %14, %20 : vector<4x256xf32>
    %66 = arith.addf %26, %32 : vector<4x256xf32>
    %67 = arith.addf %38, %44 : vector<4x256xf32>
    %68 = arith.addf %50, %56 : vector<4x256xf32>
    %69 = arith.addf %65, %66 : vector<4x256xf32>
    %70 = arith.addf %67, %68 : vector<4x256xf32>
    %71 = arith.addf %69, %70 : vector<4x256xf32>
    %72 = arith.addf %71, %62 : vector<4x256xf32>
    %c0_19 = arith.constant 0 : index
    %c0_20 = arith.constant 0 : index
    %c0_21 = arith.constant 0 : index
    %73 = vector.load %arg3[%c0_19, %c0_20, %c0_21] : memref<1x4x256xf32, #tpu.memory_space<vmem>>, vector<1x4x256xf32>
    %74 = vector.shape_cast %73 : vector<1x4x256xf32> to vector<4x256xf32>
    %75 = arith.addf %74, %72 : vector<4x256xf32>
    %c0_22 = arith.constant 0 : index
    %c0_23 = arith.constant 0 : index
    %c0_24 = arith.constant 0 : index
    %76 = vector.load %arg7[%c0_22, %c0_23, %c0_24] : memref<1x4x256xf32, #tpu.memory_space<vmem>>, vector<1x4x256xf32>
    %77 = vector.shape_cast %76 : vector<1x4x256xf32> to vector<4x256xf32>
    %78 = vector.shape_cast %75 : vector<4x256xf32> to vector<1x4x256xf32>
    tpu.vector_store %arg7[%c0_22, %c0_23, %c0_24], %78 {strides = array<i32>} : memref<1x4x256xf32, #tpu.memory_space<vmem>>, vector<1x4x256xf32>,
    %79 = tpu.concatenate %16, %22, %28, %34, %40, %46, %52, %58, %64 in 0 : vector<1x256xf32>, vector<1x256xf32>, vector<1x256xf32>, vector<1x256xf32>, vector<1x256xf32>, vector<1x256xf32>, vector<1x256xf32>, vector<1x256xf32>, vector<1x256xf32> -> vector<9x256xf32>
    %cst_25 = arith.constant 2.500000e-01 : f32
    %80 = vector.broadcast %cst_25 : f32 to vector<9x256xf32>
    %81 = arith.mulf %79, %80 : vector<9x256xf32>
    %c0_26 = arith.constant 0 : index
    %c0_27 = arith.constant 0 : index
    %c0_28 = arith.constant 0 : index
    %82 = vector.load %arg8[%c0_26, %c0_27, %c0_28] : memref<1x9x256xf32, #tpu.memory_space<vmem>>, vector<1x9x256xf32>
    %83 = vector.shape_cast %82 : vector<1x9x256xf32> to vector<9x256xf32>
    %84 = vector.shape_cast %81 : vector<9x256xf32> to vector<1x9x256xf32>
    tpu.vector_store %arg8[%c0_26, %c0_27, %c0_28], %84 {strides = array<i32>} : memref<1x9x256xf32, #tpu.memory_space<vmem>>, vector<1x9x256xf32>,
    return
  }
  func.func @transform_0(%arg0: i32, %arg1: i32) -> (i32, i32, i32) {
    %c0_i32 = arith.constant 0 : i32
    %c0_i32_0 = arith.constant 0 : i32
    return %arg0, %c0_i32, %arg1 : i32, i32, i32
  }
  func.func @transform_1(%arg0: i32, %arg1: i32) -> (i32, i32, i32) {
    %c0_i32 = arith.constant 0 : i32
    %c0_i32_0 = arith.constant 0 : i32
    return %arg0, %c0_i32, %arg1 : i32, i32, i32
  }
  func.func @transform_2(%arg0: i32, %arg1: i32) -> (i32, i32) {
    %c0_i32 = arith.constant 0 : i32
    %c0_i32_0 = arith.constant 0 : i32
    %c0_i32_1 = arith.constant 0 : i32
    return %c0_i32, %c0_i32_0 : i32, i32
  }
  func.func @transform_3(%arg0: i32, %arg1: i32) -> (i32, i32) {
    %c0_i32 = arith.constant 0 : i32
    %c0_i32_0 = arith.constant 0 : i32
    %c0_i32_1 = arith.constant 0 : i32
    return %c0_i32, %c0_i32_0 : i32, i32
  }
  func.func @transform_4(%arg0: i32, %arg1: i32) -> (i32, i32, i32) {
    %c0_i32 = arith.constant 0 : i32
    %c0_i32_0 = arith.constant 0 : i32
    return %arg0, %c0_i32, %arg1 : i32, i32, i32
  }
  func.func @transform_5(%arg0: i32, %arg1: i32) -> (i32, i32, i32) {
    %c0_i32 = arith.constant 0 : i32
    %c0_i32_0 = arith.constant 0 : i32
    return %arg0, %c0_i32, %arg1 : i32, i32, i32
  }
  func.func @transform_6(%arg0: i32, %arg1: i32) -> (i32, i32, i32) {
    %c0_i32 = arith.constant 0 : i32
    %c0_i32_0 = arith.constant 0 : i32
    return %arg0, %c0_i32, %arg1 : i32, i32, i32
  }
}

module attributes {stable_mosaic.version = 11 : i64} {
  func.func @kernel(%arg0: i32, %arg1: i32, %arg2: memref<1x54x256xbf16, #tpu.memory_space<vmem>>, %arg3: memref<1x4x256xf32, #tpu.memory_space<vmem>>, %arg4: memref<36x54xbf16, #tpu.memory_space<vmem>>, %arg5: memref<36x1xf32, #tpu.memory_space<vmem>>, %arg6: memref<1x9x256xf32, #tpu.memory_space<vmem>>, %arg7: memref<1x4x256xf32, #tpu.memory_space<vmem>>, %arg8: memref<1x9x256xf32, #tpu.memory_space<vmem>>) attributes {dimension_semantics = [#tpu.dimension_semantics<parallel>, #tpu.dimension_semantics<parallel>], iteration_bounds = array<i64: 2, 1>, scalar_prefetch = 0 : i64, scratch_operands = 0 : i64, tpu.core_type = #tpu.core_type<tc>, window_params = [{transform_indices = @transform_0, window_bounds = array<i64: 1, 54, 256>}, {transform_indices = @transform_1, window_bounds = array<i64: 1, 4, 256>}, {pipeline_mode = #tpu.pipeline_mode<synchronous>, transform_indices = @transform_2, window_bounds = array<i64: 36, 54>}, {pipeline_mode = #tpu.pipeline_mode<synchronous>, transform_indices = @transform_3, window_bounds = array<i64: 36, 1>}, {transform_indices = @transform_4, window_bounds = array<i64: 1, 9, 256>}, {transform_indices = @transform_5, window_bounds = array<i64: 1, 4, 256>}, {transform_indices = @transform_6, window_bounds = array<i64: 1, 9, 256>}]} {
    %c0 = arith.constant 0 : index
    %c0_0 = arith.constant 0 : index
    %c0_1 = arith.constant 0 : index
    %0 = vector.load %arg2[%c0, %c0_0, %c0_1] : memref<1x54x256xbf16, #tpu.memory_space<vmem>>, vector<1x54x256xbf16>
    %1 = vector.shape_cast %0 : vector<1x54x256xbf16> to vector<54x256xbf16>
    %c0_2 = arith.constant 0 : index
    %c0_3 = arith.constant 0 : index
    %2 = vector.load %arg4[%c0_2, %c0_3] : memref<36x54xbf16, #tpu.memory_space<vmem>>, vector<36x54xbf16>
    %cst = arith.constant dense<0.000000e+00> : vector<36x256xf32>
    %3 = tpu.matmul %2, %1, %cst {dimension_numbers = #tpu.dot_dimension_numbers<[1], [0], [0], [1], [0, 0, 1, 1], [], []>} : vector<36x54xbf16>, vector<54x256xbf16>, vector<36x256xf32> -> vector<36x256xf32>
    %c0_4 = arith.constant 0 : index
    %c0_5 = arith.constant 0 : index
    %4 = vector.load %arg5[%c0_4, %c0_5] : memref<36x1xf32, #tpu.memory_space<vmem>>, vector<36x1xf32>
    %5 = vector.broadcast %4 : vector<36x1xf32> to vector<36x256xf32>
    %6 = arith.addf %3, %5 : vector<36x256xf32>
    %cst_6 = arith.constant 0.000000e+00 : f32
    %7 = vector.broadcast %cst_6 : f32 to vector<36x256xf32>
    %8 = arith.maximumf %6, %7 : vector<36x256xf32>
    %c0_7 = arith.constant 0 : index
    %c0_8 = arith.constant 0 : index
    %c0_9 = arith.constant 0 : index
    %9 = vector.load %arg6[%c0_7, %c0_8, %c0_9] : memref<1x9x256xf32, #tpu.memory_space<vmem>>, vector<1x9x256xf32>
    %10 = vector.shape_cast %9 : vector<1x9x256xf32> to vector<9x256xf32>
    %11 = vector.extract_strided_slice %8 {offsets = [0, 0], sizes = [4, 256], strides = [1, 1]} : vector<36x256xf32> to vector<4x256xf32>
    %12 = vector.extract_strided_slice %10 {offsets = [0, 0], sizes = [1, 256], strides = [1, 1]} : vector<9x256xf32> to vector<1x256xf32>
    %13 = vector.broadcast %12 : vector<1x256xf32> to vector<4x256xf32>
    %14 = arith.mulf %11, %13 : vector<4x256xf32>
    %cst_10 = arith.constant dense<0.000000e+00> : vector<256xf32>
    %15 = vector.multi_reduction <add>, %11, %cst_10 [0] : vector<4x256xf32> to vector<256xf32>
    %16 = vector.shape_cast %15 : vector<256xf32> to vector<1x256xf32>
    %17 = vector.extract_strided_slice %8 {offsets = [4, 0], sizes = [4, 256], strides = [1, 1]} : vector<36x256xf32> to vector<4x256xf32>
    %18 = vector.extract_strided_slice %10 {offsets = [1, 0], sizes = [1, 256], strides = [1, 1]} : vector<9x256xf32> to vector<1x256xf32>
    %19 = vector.broadcast %18 : vector<1x256xf32> to vector<4x256xf32>
    %20 = arith.mulf %17, %19 : vector<4x256xf32>
    %cst_11 = arith.constant dense<0.000000e+00> : vector<256xf32>
    %21 = vector.multi_reduction <add>, %17, %cst_11 [0] : vector<4x256xf32> to vector<256xf32>
    %22 = vector.shape_cast %21 : vector<256xf32> to vector<1x256xf32>
    %23 = vector.extract_strided_slice %8 {offsets = [8, 0], sizes = [4, 256], strides = [1, 1]} : vector<36x256xf32> to vector<4x256xf32>
    %24 = vector.extract_strided_slice %10 {offsets = [2, 0], sizes = [1, 256], strides = [1, 1]} : vector<9x256xf32> to vector<1x256xf32>
    %25 = vector.broadcast %24 : vector<1x256xf32> to vector<4x256xf32>
    %26 = arith.mulf %23, %25 : vector<4x256xf32>
    %cst_12 = arith.constant dense<0.000000e+00> : vector<256xf32>
    %27 = vector.multi_reduction <add>, %23, %cst_12 [0] : vector<4x256xf32> to vector<256xf32>
    %28 = vector.shape_cast %27 : vector<256xf32> to vector<1x256xf32>
    %29 = vector.extract_strided_slice %8 {offsets = [12, 0], sizes = [4, 256], strides = [1, 1]} : vector<36x256xf32> to vector<4x256xf32>
    %30 = vector.extract_strided_slice %10 {offsets = [3, 0], sizes = [1, 256], strides = [1, 1]} : vector<9x256xf32> to vector<1x256xf32>
    %31 = vector.broadcast %30 : vector<1x256xf32> to vector<4x256xf32>
    %32 = arith.mulf %29, %31 : vector<4x256xf32>
    %cst_13 = arith.constant dense<0.000000e+00> : vector<256xf32>
    %33 = vector.multi_reduction <add>, %29, %cst_13 [0] : vector<4x256xf32> to vector<256xf32>
    %34 = vector.shape_cast %33 : vector<256xf32> to vector<1x256xf32>
    %35 = vector.extract_strided_slice %8 {offsets = [16, 0], sizes = [4, 256], strides = [1, 1]} : vector<36x256xf32> to vector<4x256xf32>
    %36 = vector.extract_strided_slice %10 {offsets = [4, 0], sizes = [1, 256], strides = [1, 1]} : vector<9x256xf32> to vector<1x256xf32>
    %37 = vector.broadcast %36 : vector<1x256xf32> to vector<4x256xf32>
    %38 = arith.mulf %35, %37 : vector<4x256xf32>
    %cst_14 = arith.constant dense<0.000000e+00> : vector<256xf32>
    %39 = vector.multi_reduction <add>, %35, %cst_14 [0] : vector<4x256xf32> to vector<256xf32>
    %40 = vector.shape_cast %39 : vector<256xf32> to vector<1x256xf32>
    %41 = vector.extract_strided_slice %8 {offsets = [20, 0], sizes = [4, 256], strides = [1, 1]} : vector<36x256xf32> to vector<4x256xf32>
    %42 = vector.extract_strided_slice %10 {offsets = [5, 0], sizes = [1, 256], strides = [1, 1]} : vector<9x256xf32> to vector<1x256xf32>
    %43 = vector.broadcast %42 : vector<1x256xf32> to vector<4x256xf32>
    %44 = arith.mulf %41, %43 : vector<4x256xf32>
    %cst_15 = arith.constant dense<0.000000e+00> : vector<256xf32>
    %45 = vector.multi_reduction <add>, %41, %cst_15 [0] : vector<4x256xf32> to vector<256xf32>
    %46 = vector.shape_cast %45 : vector<256xf32> to vector<1x256xf32>
    %47 = vector.extract_strided_slice %8 {offsets = [24, 0], sizes = [4, 256], strides = [1, 1]} : vector<36x256xf32> to vector<4x256xf32>
    %48 = vector.extract_strided_slice %10 {offsets = [6, 0], sizes = [1, 256], strides = [1, 1]} : vector<9x256xf32> to vector<1x256xf32>
    %49 = vector.broadcast %48 : vector<1x256xf32> to vector<4x256xf32>
    %50 = arith.mulf %47, %49 : vector<4x256xf32>
    %cst_16 = arith.constant dense<0.000000e+00> : vector<256xf32>
    %51 = vector.multi_reduction <add>, %47, %cst_16 [0] : vector<4x256xf32> to vector<256xf32>
    %52 = vector.shape_cast %51 : vector<256xf32> to vector<1x256xf32>
    %53 = vector.extract_strided_slice %8 {offsets = [28, 0], sizes = [4, 256], strides = [1, 1]} : vector<36x256xf32> to vector<4x256xf32>
    %54 = vector.extract_strided_slice %10 {offsets = [7, 0], sizes = [1, 256], strides = [1, 1]} : vector<9x256xf32> to vector<1x256xf32>
    %55 = vector.broadcast %54 : vector<1x256xf32> to vector<4x256xf32>
    %56 = arith.mulf %53, %55 : vector<4x256xf32>
    %cst_17 = arith.constant dense<0.000000e+00> : vector<256xf32>
    %57 = vector.multi_reduction <add>, %53, %cst_17 [0] : vector<4x256xf32> to vector<256xf32>
    %58 = vector.shape_cast %57 : vector<256xf32> to vector<1x256xf32>
    %59 = vector.extract_strided_slice %8 {offsets = [32, 0], sizes = [4, 256], strides = [1, 1]} : vector<36x256xf32> to vector<4x256xf32>
    %60 = vector.extract_strided_slice %10 {offsets = [8, 0], sizes = [1, 256], strides = [1, 1]} : vector<9x256xf32> to vector<1x256xf32>
    %61 = vector.broadcast %60 : vector<1x256xf32> to vector<4x256xf32>
    %62 = arith.mulf %59, %61 : vector<4x256xf32>
    %cst_18 = arith.constant dense<0.000000e+00> : vector<256xf32>
    %63 = vector.multi_reduction <add>, %59, %cst_18 [0] : vector<4x256xf32> to vector<256xf32>
    %64 = vector.shape_cast %63 : vector<256xf32> to vector<1x256xf32>
    %65 = arith.addf %14, %20 : vector<4x256xf32>
    %66 = arith.addf %26, %32 : vector<4x256xf32>
    %67 = arith.addf %38, %44 : vector<4x256xf32>
    %68 = arith.addf %50, %56 : vector<4x256xf32>
    %69 = arith.addf %65, %66 : vector<4x256xf32>
    %70 = arith.addf %67, %68 : vector<4x256xf32>
    %71 = arith.addf %69, %70 : vector<4x256xf32>
    %72 = arith.addf %71, %62 : vector<4x256xf32>
    %c0_19 = arith.constant 0 : index
    %c0_20 = arith.constant 0 : index
    %c0_21 = arith.constant 0 : index
    %73 = vector.load %arg3[%c0_19, %c0_20, %c0_21] : memref<1x4x256xf32, #tpu.memory_space<vmem>>, vector<1x4x256xf32>
    %74 = vector.shape_cast %73 : vector<1x4x256xf32> to vector<4x256xf32>
    %75 = arith.addf %74, %72 : vector<4x256xf32>
    %c0_22 = arith.constant 0 : index
    %c0_23 = arith.constant 0 : index
    %c0_24 = arith.constant 0 : index
    %76 = vector.load %arg7[%c0_22, %c0_23, %c0_24] : memref<1x4x256xf32, #tpu.memory_space<vmem>>, vector<1x4x256xf32>
    %77 = vector.shape_cast %76 : vector<1x4x256xf32> to vector<4x256xf32>
    %78 = vector.shape_cast %75 : vector<4x256xf32> to vector<1x4x256xf32>
    tpu.vector_store %arg7[%c0_22, %c0_23, %c0_24], %78 {strides = array<i32>} : memref<1x4x256xf32, #tpu.memory_space<vmem>>, vector<1x4x256xf32>,
    %79 = tpu.concatenate %16, %22, %28, %34, %40, %46, %52, %58, %64 in 0 : vector<1x256xf32>, vector<1x256xf32>, vector<1x256xf32>, vector<1x256xf32>, vector<1x256xf32>, vector<1x256xf32>, vector<1x256xf32>, vector<1x256xf32>, vector<1x256xf32> -> vector<9x256xf32>
    %cst_25 = arith.constant 2.500000e-01 : f32
    %80 = vector.broadcast %cst_25 : f32 to vector<9x256xf32>
    %81 = arith.mulf %79, %80 : vector<9x256xf32>
    %c0_26 = arith.constant 0 : index
    %c0_27 = arith.constant 0 : index
    %c0_28 = arith.constant 0 : index
    %82 = vector.load %arg8[%c0_26, %c0_27, %c0_28] : memref<1x9x256xf32, #tpu.memory_space<vmem>>, vector<1x9x256xf32>
    %83 = vector.shape_cast %82 : vector<1x9x256xf32> to vector<9x256xf32>
    %84 = vector.shape_cast %81 : vector<9x256xf32> to vector<1x9x256xf32>
    tpu.vector_store %arg8[%c0_26, %c0_27, %c0_28], %84 {strides = array<i32>} : memref<1x9x256xf32, #tpu.memory_space<vmem>>, vector<1x9x256xf32>,
    return
  }
  func.func @transform_0(%arg0: i32, %arg1: i32) -> (i32, i32, i32) {
    %c0_i32 = arith.constant 0 : i32
    %c0_i32_0 = arith.constant 0 : i32
    return %arg0, %c0_i32, %arg1 : i32, i32, i32
  }
  func.func @transform_1(%arg0: i32, %arg1: i32) -> (i32, i32, i32) {
    %c0_i32 = arith.constant 0 : i32
    %c0_i32_0 = arith.constant 0 : i32
    return %arg0, %c0_i32, %arg1 : i32, i32, i32
  }
  func.func @transform_2(%arg0: i32, %arg1: i32) -> (i32, i32) {
    %c0_i32 = arith.constant 0 : i32
    %c0_i32_0 = arith.constant 0 : i32
    %c0_i32_1 = arith.constant 0 : i32
    return %c0_i32, %c0_i32_0 : i32, i32
  }
  func.func @transform_3(%arg0: i32, %arg1: i32) -> (i32, i32) {
    %c0_i32 = arith.constant 0 : i32
    %c0_i32_0 = arith.constant 0 : i32
    %c0_i32_1 = arith.constant 0 : i32
    return %c0_i32, %c0_i32_0 : i32, i32
  }
  func.func @transform_4(%arg0: i32, %arg1: i32) -> (i32, i32, i32) {
    %c0_i32 = arith.constant 0 : i32
    %c0_i32_0 = arith.constant 0 : i32
    return %arg0, %c0_i32, %arg1 : i32, i32, i32
  }
  func.func @transform_5(%arg0: i32, %arg1: i32) -> (i32, i32, i32) {
    %c0_i32 = arith.constant 0 : i32
    %c0_i32_0 = arith.constant 0 : i32
    return %arg0, %c0_i32, %arg1 : i32, i32, i32
  }
  func.func @transform_6(%arg0: i32, %arg1: i32) -> (i32, i32, i32) {
    %c0_i32 = arith.constant 0 : i32
    %c0_i32_0 = arith.constant 0 : i32
    return %arg0, %c0_i32, %arg1 : i32, i32, i32
  }
}

</mosaic_0001>

<llo_original>
// kernel: tpu_custom_call.1
$region0: #{tpu_custom_call.1}
  #allocation0 [shape = 'u32[]', space=smem, size = 0x4, offset = 0x4, fixed_abs, tag = 'smem constant byte address 0x4 - core index']
  #allocation1 [shape = 'u32[144,128]{1,0:T(1,128)}', space=vmem, size = 0x12000, scoped, tag = 'internal scratch']
  %s0 = inlined_call_operand.vmem [shape: bf16[2,54,256], index: 0, kind: input, shape index: {}]
  %s1 = inlined_call_operand.vmem [shape: f32[2,4,256], index: 1, kind: input, shape index: {}]
  %s2 = inlined_call_operand.vmem [shape: bf16[36,54], index: 2, kind: input, shape index: {}]
  %s3 = inlined_call_operand.vmem [shape: f32[36,1], index: 3, kind: input, shape index: {}]
  %s4 = inlined_call_operand.vmem [shape: f32[2,9,256], index: 4, kind: input, shape index: {}]
  %s5 = inlined_call_operand.hbm [shape: f32[2,4,256], index: 5, kind: output, shape index: {0}]
  %s6 = inlined_call_operand.vmem [shape: f32[2,9,256], index: 6, kind: output, shape index: {1}]
  %7 = xla_tuple %s5, %s6
  %s8 = sld [smem:[#allocation0]]
  $region61: #{tpu_custom_call.1} parent=0
    _
  %s10 = ssub.s32 1, %s8
  %s11 = scalar_select 0, %s10, %s8
  $region1: #{tpu_custom_call.1} parent=0
    #allocation2 [shape = 'u8[8192]{0}', space=vmem, size = 0x2000, scoped, tag = 'output window, operand 0']
    #allocation3 [shape = 's32[2]{0}', space=sflag, size = 0x8, scoped, tag = 'scoped memory for tpu_custom_call.1']
    %12 = vsyncpa [#allocation3], 0
    %s13 = scalar_lea.sflag [#allocation3], 1
    %14 = vsyncpa %s13, 0
    loop: start=0, step=1, limit=4
    $region2: #{tpu_custom_call.1} parent=1 // loop_pre_header
      _
    $region3: #{tpu_custom_call.1} parent=1 // loop_header
      %s16 = sphi 0, %s20
      %p17 = scmp.ge.s32.totalorder %s16, 4
      %s23 = sphi 0, %s35
      %s24 = sphi 0, %s31
      %s25 = sphi 0, %s23
      %s26 = sphi 0, %s24
      %s27 = sphi 0, %s25
      %s28 = sphi 0, %s26
      %s40 = sphi 0, %s42
      %s43 = sphi 0, %s40
      %s44 = sphi 0, %s43
      %s60 = sphi 0, %s44
      %s68 = sphi 0, %s70
      %s71 = sphi 0, %s68
      %s72 = sphi 0, %s71
      %s88 = sphi 0, %s72
      %s92 = sphi 0, %s92
      %s94 = sphi 0, %s92
      %s95 = sphi 0, %s94
      %s109 = sphi 0, %s95
      %s113 = sphi 0, %s113
      %s115 = sphi 0, %s113
      %s116 = sphi 0, %s115
      %s130 = sphi 0, %s116
      %s138 = sphi 0, %s140
      %s141 = sphi 0, %s138
      %s142 = sphi 0, %s141
      %s158 = sphi 0, %s142
      %s166 = sphi 0, %s168
      %s169 = sphi 0, %s166
      %s170 = sphi 0, %s169
      %s186 = sphi 0, %s170
      %s194 = sphi 0, %s196
      %s197 = sphi 0, %s194
      %s198 = sphi 0, %s197
      %s214 = sphi 0, %s198
    $region4: #{tpu_custom_call.1} parent=1 // loop_header_branch
      %19 = sbr.rel (%p17) target = $region8
    $region5: #{tpu_custom_call.1} parent=1 // loop_body
      %s21 = ssub.s32 %s16, 1
      %s22 = ssub.s32 %s16, 2
      %s29 = sadd.s32 1, %s24
      %p30 = scmp.ge.s32.totalorder %s29, 1
      %s31 = scalar_select %p30, 0, %s29
      %s32 = sadd.s32 1, %s23
      %s33 = scalar_select %p30, %s32, %s23
      %p34 = scmp.ge.s32.totalorder %s33, 2
      %s35 = scalar_select %p34, 0, %s33
      %s36 = ssub.s32 %s23, %s35
      %s37 = ssub.s32 %s24, %s31
      %s38 = sor.u32 %s36, %s37
      %p39 = scmp.eq.s32.totalorder %s38, 0
      %s41 = sadd.s32 %s40, 1
      %s42 = scalar_select %p39, %s40, %s41
      %p45 = pneg %p39
      %p46 = scmp.eq.s32.totalorder %s16, 1
      %p47 = por %p45, %p46
      %p48 = scmp.ne.s32.totalorder %s40, %s43
      %p49 = scmp.eq.s32.totalorder %s16, 0
      %p50 = por %p48, %p49
      %p51 = scmp.ne.s32.totalorder %s40, %s43
      %p52 = scmp.eq.s32.totalorder %s21, 1
      %p53 = por %p51, %p52
      %p54 = scmp.ne.s32.totalorder %s43, %s44
      %p55 = scmp.eq.s32.totalorder %s21, 0
      %p56 = por %p54, %p55
      %p57 = scmp.ne.s32.totalorder %s43, %s44
      %p58 = scmp.eq.s32.totalorder %s22, 1
      %p59 = por %p57, %p58
      %p61 = scmp.ne.s32.totalorder %s44, %s60
      %p62 = scmp.eq.s32.totalorder %s22, 0
      %p63 = por %p61, %p62
      %s64 = ssub.s32 %s23, %s35
      %s65 = ssub.s32 %s24, %s31
      %s66 = sor.u32 %s64, %s65
      %p67 = scmp.eq.s32.totalorder %s66, 0
      %s69 = sadd.s32 %s68, 1
      %s70 = scalar_select %p67, %s68, %s69
      %p73 = pneg %p67
      %p74 = scmp.eq.s32.totalorder %s16, 1
      %p75 = por %p73, %p74
      %p76 = scmp.ne.s32.totalorder %s68, %s71
      %p77 = scmp.eq.s32.totalorder %s16, 0
      %p78 = por %p76, %p77
      %p79 = scmp.ne.s32.totalorder %s68, %s71
      %p80 = scmp.eq.s32.totalorder %s21, 1
      %p81 = por %p79, %p80
      %p82 = scmp.ne.s32.totalorder %s71, %s72
      %p83 = scmp.eq.s32.totalorder %s21, 0
      %p84 = por %p82, %p83
      %p85 = scmp.ne.s32.totalorder %s71, %s72
      %p86 = scmp.eq.s32.totalorder %s22, 1
      %p87 = por %p85, %p86
      %p89 = scmp.ne.s32.totalorder %s72, %s88
      %p90 = scmp.eq.s32.totalorder %s22, 0
      %p91 = por %p89, %p90
      %s93 = sadd.s32 %s92, 1
      %p96 = scmp.eq.s32.totalorder %s16, 1
      %p97 = scmp.ne.s32.totalorder %s92, %s94
      %p98 = scmp.eq.s32.totalorder %s16, 0
      %p99 = por %p97, %p98
      %p100 = scmp.ne.s32.totalorder %s92, %s94
      %p101 = scmp.eq.s32.totalorder %s21, 1
      %p102 = por %p100, %p101
      %p103 = scmp.ne.s32.totalorder %s94, %s95
      %p104 = scmp.eq.s32.totalorder %s21, 0
      %p105 = por %p103, %p104
      %p106 = scmp.ne.s32.totalorder %s94, %s95
      %p107 = scmp.eq.s32.totalorder %s22, 1
      %p108 = por %p106, %p107
      %p110 = scmp.ne.s32.totalorder %s95, %s109
      %p111 = scmp.eq.s32.totalorder %s22, 0
      %p112 = por %p110, %p111
      %s114 = sadd.s32 %s113, 1
      %p117 = scmp.eq.s32.totalorder %s16, 1
      %p118 = scmp.ne.s32.totalorder %s113, %s115
      %p119 = scmp.eq.s32.totalorder %s16, 0
      %p120 = por %p118, %p119
      %p121 = scmp.ne.s32.totalorder %s113, %s115
      %p122 = scmp.eq.s32.totalorder %s21, 1
      %p123 = por %p121, %p122
      %p124 = scmp.ne.s32.totalorder %s115, %s116
      %p125 = scmp.eq.s32.totalorder %s21, 0
      %p126 = por %p124, %p125
      %p127 = scmp.ne.s32.totalorder %s115, %s116
      %p128 = scmp.eq.s32.totalorder %s22, 1
      %p129 = por %p127, %p128
      %p131 = scmp.ne.s32.totalorder %s116, %s130
      %p132 = scmp.eq.s32.totalorder %s22, 0
      %p133 = por %p131, %p132
      %s134 = ssub.s32 %s23, %s35
      %s135 = ssub.s32 %s24, %s31
      %s136 = sor.u32 %s134, %s135
      %p137 = scmp.eq.s32.totalorder %s136, 0
      %s139 = sadd.s32 %s138, 1
      %s140 = scalar_select %p137, %s138, %s139
      %p143 = pneg %p137
      %p144 = scmp.eq.s32.totalorder %s16, 1
      %p145 = por %p143, %p144
      %p146 = scmp.ne.s32.totalorder %s138, %s141
      %p147 = scmp.eq.s32.totalorder %s16, 0
      %p148 = por %p146, %p147
      %p149 = scmp.ne.s32.totalorder %s138, %s141
      %p150 = scmp.eq.s32.totalorder %s21, 1
      %p151 = por %p149, %p150
      %p152 = scmp.ne.s32.totalorder %s141, %s142
      %p153 = scmp.eq.s32.totalorder %s21, 0
      %p154 = por %p152, %p153
      %p155 = scmp.ne.s32.totalorder %s141, %s142
      %p156 = scmp.eq.s32.totalorder %s22, 1
      %p157 = por %p155, %p156
      %p159 = scmp.ne.s32.totalorder %s142, %s158
      %p160 = scmp.eq.s32.totalorder %s22, 0
      %p161 = por %p159, %p160
      %s162 = ssub.s32 %s23, %s35
      %s163 = ssub.s32 %s24, %s31
      %s164 = sor.u32 %s162, %s163
      %p165 = scmp.eq.s32.totalorder %s164, 0
      %s167 = sadd.s32 %s166, 1
      %s168 = scalar_select %p165, %s166, %s167
      %p171 = pneg %p165
      %p172 = scmp.eq.s32.totalorder %s16, 1
      %p173 = por %p171, %p172
      %p174 = scmp.ne.s32.totalorder %s166, %s169
      %p175 = scmp.eq.s32.totalorder %s16, 0
      %p176 = por %p174, %p175
      %p177 = scmp.ne.s32.totalorder %s166, %s169
      %p178 = scmp.eq.s32.totalorder %s21, 1
      %p179 = por %p177, %p178
      %p180 = scmp.ne.s32.totalorder %s169, %s170
      %p181 = scmp.eq.s32.totalorder %s21, 0
      %p182 = por %p180, %p181
      %p183 = scmp.ne.s32.totalorder %s169, %s170
      %p184 = scmp.eq.s32.totalorder %s22, 1
      %p185 = por %p183, %p184
      %p187 = scmp.ne.s32.totalorder %s170, %s186
      %p188 = scmp.eq.s32.totalorder %s22, 0
      %p189 = por %p187, %p188
      %s190 = ssub.s32 %s23, %s35
      %s191 = ssub.s32 %s24, %s31
      %s192 = sor.u32 %s190, %s191
      %p193 = scmp.eq.s32.totalorder %s192, 0
      %s195 = sadd.s32 %s194, 1
      %s196 = scalar_select %p193, %s194, %s195
      %p199 = pneg %p193
      %p200 = scmp.eq.s32.totalorder %s16, 1
      %p201 = por %p199, %p200
      %p202 = scmp.ne.s32.totalorder %s194, %s197
      %p203 = scmp.eq.s32.totalorder %s16, 0
      %p204 = por %p202, %p203
      %p205 = scmp.ne.s32.totalorder %s194, %s197
      %p206 = scmp.eq.s32.totalorder %s21, 1
      %p207 = por %p205, %p206
      %p208 = scmp.ne.s32.totalorder %s197, %s198
      %p209 = scmp.eq.s32.totalorder %s21, 0
      %p210 = por %p208, %p209
      %p211 = scmp.ne.s32.totalorder %s197, %s198
      %p212 = scmp.eq.s32.totalorder %s22, 1
      %p213 = por %p211, %p212
      %p215 = scmp.ne.s32.totalorder %s198, %s214
      %p216 = scmp.eq.s32.totalorder %s22, 0
      %p217 = por %p215, %p216
      %p218 = scmp.le.s32.totalorder 1, %s16
      %p219 = scmp.lt.s32.totalorder %s16, 3
      %p220 = pnand %p218, %p219
      %p221 = pneg %p220
      // Predicated region
      $region9: #{tpu_custom_call.1} parent=5 // pred_check
        _
      $region10: #{tpu_custom_call.1} parent=5 // pred_check_branch
        %223 = sbr.rel (%p220) target = $region12
      $region11: #{tpu_custom_call.1} parent=5 // pred_region
        %s224 = ssub.s32 %s16, 1
        // Predicated region
        $region13: #{tpu_custom_call.1} parent=11 // pred_check
          %p225 = pneg %p105
        $region14: #{tpu_custom_call.1} parent=11 // pred_check_branch
          %227 = sbr.rel (%p225) target = $region16
        $region15: #{tpu_custom_call.1} parent=11 // pred_region
          _
        $region16: #{tpu_custom_call.1} parent=11 // pred_fallthru
          _
        // Predicated region
        $region17: #{tpu_custom_call.1} parent=11 // pred_check
          %p228 = pneg %p126
        $region18: #{tpu_custom_call.1} parent=11 // pred_check_branch
          %230 = sbr.rel (%p228) target = $region20
        $region19: #{tpu_custom_call.1} parent=11 // pred_region
          _
        $region20: #{tpu_custom_call.1} parent=11 // pred_fallthru
          _
      $region12: #{tpu_custom_call.1} parent=5 // pred_fallthru
        _
      %p231 = scmp.lt.s32.totalorder %s16, 2
      // Predicated region
      $region21: #{tpu_custom_call.1} parent=5 // pred_check
        %p232 = pneg %p231
      $region22: #{tpu_custom_call.1} parent=5 // pred_check_branch
        %234 = sbr.rel (%p232) target = $region24
      $region23: #{tpu_custom_call.1} parent=5 // pred_region
        // Predicated region
        $region25: #{tpu_custom_call.1} parent=23 // pred_check
          %p235 = pneg %p50
        $region26: #{tpu_custom_call.1} parent=23 // pred_check_branch
          %237 = sbr.rel (%p235) target = $region28
        $region27: #{tpu_custom_call.1} parent=23 // pred_region
          %s238 = smul.u32 2, %s24
          %p239 = scmp.lt.s32.totalorder %s23, 1
          %s240 = scalar_select %p239, %s23, 1
          %p241 = scmp.lt.s32.totalorder %s238, 1
          %s242 = scalar_select %p241, %s238, 1
          %s243 = smul.addr %s240, 14
          %s244 = sadd.s32 %s242, %s243
          %s245 = smul.addr %s244, 4
          %s246 = scalar_lea.vmem %s0, %s245
          %s247 = smul.u32 2, %s24
        $region28: #{tpu_custom_call.1} parent=23 // pred_fallthru
          _
        // Predicated region
        $region29: #{tpu_custom_call.1} parent=23 // pred_check
          %p248 = pneg %p78
        $region30: #{tpu_custom_call.1} parent=23 // pred_check_branch
          %250 = sbr.rel (%p248) target = $region32
        $region31: #{tpu_custom_call.1} parent=23 // pred_region
          %s251 = smul.u32 2, %s24
          %p252 = scmp.lt.s32.totalorder %s23, 1
          %s253 = scalar_select %p252, %s23, 1
          %p254 = scmp.lt.s32.totalorder %s251, 1
          %s255 = scalar_select %p254, %s251, 1
          %s256 = smul.addr %s253, 2
          %s257 = sadd.s32 %s255, %s256
          %s258 = smul.addr %s257, 4
          %s259 = scalar_lea.vmem %s1, %s258
          %s260 = smul.u32 2, %s24
        $region32: #{tpu_custom_call.1} parent=23 // pred_fallthru
          _
        // Predicated region
        $region33: #{tpu_custom_call.1} parent=23 // pred_check
          %p261 = pneg %p148
        $region34: #{tpu_custom_call.1} parent=23 // pred_check_branch
          %263 = sbr.rel (%p261) target = $region36
        $region35: #{tpu_custom_call.1} parent=23 // pred_region
          %s264 = smul.u32 2, %s24
          %p265 = scmp.lt.s32.totalorder %s23, 1
          %s266 = scalar_select %p265, %s23, 1
          %p267 = scmp.lt.s32.totalorder %s264, 1
          %s268 = scalar_select %p267, %s264, 1
          %s269 = smul.addr %s266, 4
          %s270 = sadd.s32 %s268, %s269
          %s271 = smul.addr %s270, 8
          %s272 = scalar_lea.vmem %s4, %s271
          %s273 = smul.u32 2, %s24
        $region36: #{tpu_custom_call.1} parent=23 // pred_fallthru
          _
      $region24: #{tpu_custom_call.1} parent=5 // pred_fallthru
        _
      %p274 = scmp.le.s32.totalorder 1, %s16
      %p275 = scmp.lt.s32.totalorder %s16, 3
      %p276 = pnand %p274, %p275
      %p277 = pneg %p276
      // Predicated region
      $region37: #{tpu_custom_call.1} parent=5 // pred_check
        _
      $region38: #{tpu_custom_call.1} parent=5 // pred_check_branch
        %279 = sbr.rel (%p276) target = $region40
      $region39: #{tpu_custom_call.1} parent=5 // pred_region
        %s280 = ssub.s32 %s16, 1
        %s281 = smul.u32 2, %s26
        %p282 = scmp.lt.s32.totalorder %s25, 1
        %s283 = scalar_select %p282, %s25, 1
        %p284 = scmp.lt.s32.totalorder %s281, 1
        %s285 = scalar_select %p284, %s281, 1
        %s286 = smul.addr %s283, 14
        %s287 = sadd.s32 %s285, %s286
        %s288 = smul.addr %s287, 4
        %s289 = scalar_lea.vmem %s0, %s288
        %p290 = pneg %p56
        %p291 = pneg %p53
        %s292 = smul.u32 2, %s26
        %p293 = scmp.lt.s32.totalorder %s25, 1
        %s294 = scalar_select %p293, %s25, 1
        %p295 = scmp.lt.s32.totalorder %s292, 1
        %s296 = scalar_select %p295, %s292, 1
        %s297 = smul.addr %s294, 2
        %s298 = sadd.s32 %s296, %s297
        %s299 = smul.addr %s298, 4
        %s300 = scalar_lea.vmem %s1, %s299
        %p301 = pneg %p84
        %p302 = pneg %p81
        %p303 = pneg %p105
        %p304 = pneg %p102
        %p305 = pneg %p126
        %p306 = pneg %p123
        %s307 = smul.u32 2, %s26
        %p308 = scmp.lt.s32.totalorder %s25, 1
        %s309 = scalar_select %p308, %s25, 1
        %p310 = scmp.lt.s32.totalorder %s307, 1
        %s311 = scalar_select %p310, %s307, 1
        %s312 = smul.addr %s309, 4
        %s313 = sadd.s32 %s311, %s312
        %s314 = smul.addr %s313, 8
        %s315 = scalar_lea.vmem %s4, %s314
        %p316 = pneg %p154
        %p317 = pneg %p151
        %p318 = pneg %p182
        %p319 = pneg %p179
        %s320 = sand.u32 %s169, 1
        %s321 = scalar_lea.sflag [#allocation3], %s320
        %s322 = sand.u32 %s169, 1
        %s323 = smul.addr %s322, 8
        %s324 = scalar_lea.vmem [#allocation2], %s323
        %p325 = pneg %p210
        %p326 = pneg %p207
        %s327 = smul.u32 2, %s26
        %p328 = scmp.lt.s32.totalorder %s25, 1
        %s329 = scalar_select %p328, %s25, 1
        %p330 = scmp.lt.s32.totalorder %s327, 1
        %s331 = scalar_select %p330, %s327, 1
        %s332 = smul.addr %s329, 4
        %s333 = sadd.s32 %s331, %s332
        %s334 = smul.addr %s333, 8
        %s335 = scalar_lea.vmem %s6, %s334
        %s336 = smul.u32 2, %s26
        %p337 = scmp.lt.s32.totalorder %s25, 1
        %s338 = scalar_select %p337, %s25, 1
        %p339 = scmp.lt.s32.totalorder %s336, 1
        %s340 = scalar_select %p339, %s336, 1
        %s341 = smul.addr %s338, 14
        %s342 = sadd.s32 %s340, %s341
        %s343 = smul.addr %s342, 4
        %s344 = scalar_lea.vmem %s0, %s343
        %s345 = smul.u32 2, %s26
        %s346 = smul.u32 2, %s26
        %p347 = scmp.lt.s32.totalorder %s25, 1
        %s348 = scalar_select %p347, %s25, 1
        %p349 = scmp.lt.s32.totalorder %s346, 1
        %s350 = scalar_select %p349, %s346, 1
        %s351 = smul.addr %s348, 2
        %s352 = sadd.s32 %s350, %s351
        %s353 = smul.addr %s352, 4
        %s354 = scalar_lea.vmem %s1, %s353
        %s355 = smul.u32 2, %s26
        %s356 = smul.u32 2, %s26
        %p357 = scmp.lt.s32.totalorder %s25, 1
        %s358 = scalar_select %p357, %s25, 1
        %p359 = scmp.lt.s32.totalorder %s356, 1
        %s360 = scalar_select %p359, %s356, 1
        %s361 = smul.addr %s358, 4
        %s362 = sadd.s32 %s360, %s361
        %s363 = smul.addr %s362, 8
        %s364 = scalar_lea.vmem %s4, %s363
        %s365 = smul.u32 2, %s26
        %s366 = smul.u32 2, %s26
        %s367 = smul.u32 2, %s26
        %p368 = scmp.lt.s32.totalorder %s25, 1
        %s369 = scalar_select %p368, %s25, 1
        %p370 = scmp.lt.s32.totalorder %s367, 1
        %s371 = scalar_select %p370, %s367, 1
        %s372 = smul.addr %s369, 4
        %s373 = sadd.s32 %s371, %s372
        %s374 = smul.addr %s373, 8
        %s375 = scalar_lea.vmem %s6, %s374
        %s376 = smul.u32 2, %s26
        %v378 = vld [vmem:[%s344] sm:$0xff]
        %v379 = vld [vmem:[%s344 + $0x8] sm:$0xff]
        %v380 = vld [vmem:[%s344 + $0x10] sm:$0xff]
        %v381 = vld [vmem:[%s344 + $0x18] sm:$0xff]
        %v382 = vld [vmem:[%s344 + $0x20] sm:$0xff]
        %v383 = vld [vmem:[%s344 + $0x28] sm:$0xff]
        %v384 = vld [vmem:[%s344 + $0x30] sm:$0x77]
        %v385 = vld [vmem:[%s2] sm:$0xf]
        %v386 = vld [vmem:[%s2 + $0x4] sm:$0xf]
        %v387 = vld [vmem:[%s2 + $0x8] sm:$0xf]
        %v388 = vld [vmem:[%s2 + $0xc] sm:$0xf]
        %v389 = vld [vmem:[%s2 + $0x10] sm:$0x3]
        %v390 = vld [vmem:[%s3] sm:$0xff]
        %v391 = vld [vmem:[%s3 + $0x8] sm:$0xff]
        %v392 = vld [vmem:[%s3 + $0x10] sm:$0xff]
        %v393 = vld [vmem:[%s3 + $0x18] sm:$0xff]
        %v394 = vld [vmem:[%s3 + $0x20] sm:$0xf]
        %396 = vset.pattern.permute.xlu0 0
        %397 = vperm.xlu0 %396, %v390
        %v398 = vpop.permute.xlu0 %397
        %401 = vset.pattern.permute.xlu0 0
        %402 = vperm.xlu0 %401, %v391
        %v403 = vpop.permute.xlu0 %402
        %406 = vset.pattern.permute.xlu0 0
        %407 = vperm.xlu0 %406, %v392
        %v408 = vpop.permute.xlu0 %407
        %411 = vset.pattern.permute.xlu0 0
        %412 = vperm.xlu0 %411, %v393
        %v413 = vpop.permute.xlu0 %412
        %416 = vset.pattern.permute.xlu0 0
        %417 = vperm.xlu0 %416, %v394
        %v418 = vpop.permute.xlu0 %417
        %v425 = vunpack.c.l.b16 %v385
        %v426 = vunpack.c.l.b16 %v386
        %v427 = vunpack.c.l.b16 %v387
        %v428 = vunpack.c.l.b16 %v388
        %v429 = vunpack.c.l.b16 %v389
        %v430 = vpack.c.b16 %v426, %v425
        %v431 = vpack.c.b16 %v428, %v427
        %v432 = vpack.c.b16 %v429, %v429
        %v440 = vunpack.c.l.b16 %v378
        %v441 = vunpack.c.h.b16 %v378
        %v442 = vunpack.c.l.b16 %v379
        %v443 = vunpack.c.h.b16 %v379
        %v444 = vunpack.c.l.b16 %v380
        %v445 = vunpack.c.h.b16 %v380
        %v446 = vunpack.c.l.b16 %v381
        %v447 = vunpack.c.h.b16 %v381
        %v448 = vunpack.c.l.b16 %v382
        %v449 = vunpack.c.h.b16 %v382
        %v450 = vunpack.c.l.b16 %v383
        %v451 = vunpack.c.h.b16 %v383
        %v452 = vunpack.c.l.b16 %v384
        %v453 = vunpack.c.h.b16 %v384
        %v454 = vpack.c.b16 %v442, %v440
        %v455 = vpack.c.b16 %v443, %v441
        %v456 = vpack.c.b16 %v446, %v444
        %v457 = vpack.c.b16 %v447, %v445
        %v458 = vpack.c.b16 %v450, %v448
        %v459 = vpack.c.b16 %v451, %v449
        %v460 = vpack.c.b16 %v452, %v452
        %v461 = vpack.c.b16 %v453, %v453
        %vm468 = vcmask 441344
        %v470 = vsel %vm468, %v430, 0
        %v473 = vsel %vm468, %v431, 0
        %v476 = vsel %vm468, %v432, 0
        %vm478 = vcmask 1042432
        %v480 = vsel %vm478, %v460, 0
        %v483 = vsel %vm478, %v461, 0
        %485 = vmatprep.subr.bf16.mxu0 0
        %486 = vmatpush1.bf16.msra.mxu0 0
        %487 = vmatprep.subr.bf16.mxu0 0
        %488 = vmatpush1.bf16.msra.mxu0 0
        %489 = vmatprep.subr.bf16.mxu0 0
        %490 = vmatpush1.bf16.msra.mxu0 0
        %491 = vmatprep.subr.bf16.mxu0 0
        %492 = vmatpush1.bf16.msra.mxu0 0
        %493 = vmatprep.subr.bf16.mxu0 %v483
        %494 = vmatpush1.bf16.msra.mxu0 %v480
        %495 = vmatprep.subr.bf16.mxu0 %v459
        %496 = vmatpush1.bf16.msra.mxu0 %v458
        %497 = vmatprep.subr.bf16.mxu0 %v457
        %498 = vmatpush1.bf16.msra.mxu0 %v456
        %499 = vmatprep.subr.bf16.mxu0 %v455
        %500 = vmatpush1.bf16.msra.mxu0 %v454
        %501 = vmatprep.subr.bf16.mxu0 0
        %502 = vmatpush2.bf16.msra.mxu0 0
        %503 = vmatprep.subr.bf16.mxu0 0
        %504 = vmatpush2.bf16.msra.mxu0 0
        %505 = vmatprep.subr.bf16.mxu0 0
        %506 = vmatpush2.bf16.msra.mxu0 0
        %507 = vmatprep.subr.bf16.mxu0 0
        %508 = vmatpush2.bf16.msra.mxu0 0
        %509 = vmatprep.subr.bf16.mxu0 0
        %510 = vmatpush2.bf16.msra.mxu0 0
        %511 = vmatprep.subr.bf16.mxu0 0
        %512 = vmatpush2.bf16.msra.mxu0 0
        %513 = vmatprep.subr.bf16.mxu0 0
        %514 = vmatpush2.bf16.msra.mxu0 0
        %515 = vmatprep.subr.bf16.mxu0 0
        %516 = vmatpush2.bf16.msra.mxu0 0
        %517 = vmatprep.mubr.bf16.mxu0 0
        %518 = vmatmul.mubr.bf16.gmra.mxu0 %v470
        %v519 = vpop.f32.mrf.mxu0
        %v520 = vadd.f32 %v398, %v519
        %v521 = vpop.f32.mrf.mxu0
        %v522 = vadd.f32 %v398, %v521
        %v523 = vpop.f32.mrf.mxu0
        %v524 = vadd.f32 %v403, %v523
        %v525 = vpop.f32.mrf.mxu0
        %v526 = vadd.f32 %v403, %v525
        %527 = vmatprep.mubr.bf16.mxu0 0
        %528 = vmatmul.mubr.bf16.gmra.mxu0 %v473
        %v529 = vpop.f32.mrf.mxu0
        %v530 = vadd.f32 %v408, %v529
        %v531 = vpop.f32.mrf.mxu0
        %v532 = vadd.f32 %v408, %v531
        %v533 = vpop.f32.mrf.mxu0
        %v534 = vadd.f32 %v413, %v533
        %v535 = vpop.f32.mrf.mxu0
        %v536 = vadd.f32 %v413, %v535
        %537 = vmatprep.mubr.bf16.mxu0 0
        %538 = vmatmul.mubr.bf16.gmra.mxu0 %v476
        %v539 = vpop.f32.mrf.mxu0
        %v540 = vadd.f32 %v418, %v539
        %v541 = vpop.f32.mrf.mxu0
        %v542 = vadd.f32 %v418, %v541
        %v543 = vpop.f32.mrf.mxu0
        %v544 = vpop.f32.mrf.mxu0
        %545 = vdwg.mxu0
        %v546 = vmax.f32 %v520, 0.0
        %v547 = vmax.f32 %v522, 0.0
        %v548 = vmax.f32 %v524, 0.0
        %v549 = vmax.f32 %v526, 0.0
        %v550 = vmax.f32 %v530, 0.0
        %v551 = vmax.f32 %v532, 0.0
        %v552 = vmax.f32 %v534, 0.0
        %v553 = vmax.f32 %v536, 0.0
        %v554 = vmax.f32 %v540, 0.0
        %v555 = vmax.f32 %v542, 0.0
        %v556 = vld [vmem:[%s364] sm:$0xff]
        %v557 = vld [vmem:[%s364 + $0x8] sm:$0xff]
        %v558 = vld [vmem:[%s364 + $0x10] sm:$0x1]
        %v559 = vld [vmem:[%s364 + $0x18] sm:$0x1]
        %v560 = vlaneseq
        %v561 = vshrl.u32 %v560, 7
        %v562 = vsub.s32 0, %v561
        %v563 = vrot.slane %v556, %v562
        %v564 = vlaneseq
        %v565 = vshrl.u32 %v564, 7
        %v566 = vsub.s32 0, %v565
        %v567 = vrot.slane %v557, %v566
        %v568 = vmul.f32 %v546, %v563
        %v569 = vmul.f32 %v547, %v567
        %vm570 = vcmask 1043456
        %v571 = vsel %vm570, %v546, 0.0
        %v572 = vrot.slane %v571, 4
        %v573 = vadd.f32 %v571, %v572
        %v574 = vrot.slane %v573, 2
        %v575 = vadd.f32 %v573, %v574
        %v576 = vrot.slane %v575, 1
        %v577 = vadd.f32 %v575, %v576
        %v578 = vsel %vm570, %v547, 0.0
        %v579 = vrot.slane %v578, 4
        %v580 = vadd.f32 %v578, %v579
        %v581 = vrot.slane %v580, 2
        %v582 = vadd.f32 %v580, %v581
        %v583 = vrot.slane %v582, 1
        %v584 = vadd.f32 %v582, %v583
        %v585 = vlaneseq
        %v586 = vshrl.u32 %v585, 7
        %v587 = vsub.s32 1, %v586
        %v588 = vrot.slane %v556, %v587
        %v589 = vlaneseq
        %v590 = vshrl.u32 %v589, 7
        %v591 = vsub.s32 1, %v590
        %v592 = vrot.slane %v557, %v591
        %v593 = vmul.f32 %v546, %v588
        %v594 = vmul.f32 %v547, %v592
        %v597 = vrot.slane %v546, 4
        %v598 = vrot.slane %v547, 4
        %v601 = vsel %vm570, %v597, 0.0
        %v602 = vrot.slane %v601, 4
        %v603 = vadd.f32 %v601, %v602
        %v604 = vrot.slane %v603, 2
        %v605 = vadd.f32 %v603, %v604
        %v606 = vrot.slane %v605, 1
        %v607 = vadd.f32 %v605, %v606
        %v608 = vsel %vm570, %v598, 0.0
        %v609 = vrot.slane %v608, 4
        %v610 = vadd.f32 %v608, %v609
        %v611 = vrot.slane %v610, 2
        %v612 = vadd.f32 %v610, %v611
        %v613 = vrot.slane %v612, 1
        %v614 = vadd.f32 %v612, %v613
        %v615 = vlaneseq
        %v616 = vshrl.u32 %v615, 7
        %v617 = vsub.s32 2, %v616
        %v618 = vrot.slane %v556, %v617
        %v619 = vlaneseq
        %v620 = vshrl.u32 %v619, 7
        %v621 = vsub.s32 2, %v620
        %v622 = vrot.slane %v557, %v621
        %v623 = vmul.f32 %v548, %v618
        %v624 = vmul.f32 %v549, %v622
        %v625 = vsel %vm570, %v548, 0.0
        %v626 = vrot.slane %v625, 4
        %v627 = vadd.f32 %v625, %v626
        %v628 = vrot.slane %v627, 2
        %v629 = vadd.f32 %v627, %v628
        %v630 = vrot.slane %v629, 1
        %v631 = vadd.f32 %v629, %v630
        %v632 = vsel %vm570, %v549, 0.0
        %v633 = vrot.slane %v632, 4
        %v634 = vadd.f32 %v632, %v633
        %v635 = vrot.slane %v634, 2
        %v636 = vadd.f32 %v634, %v635
        %v637 = vrot.slane %v636, 1
        %v638 = vadd.f32 %v636, %v637
        %v639 = vlaneseq
        %v640 = vshrl.u32 %v639, 7
        %v641 = vsub.s32 3, %v640
        %v642 = vrot.slane %v556, %v641
        %v643 = vlaneseq
        %v644 = vshrl.u32 %v643, 7
        %v645 = vsub.s32 3, %v644
        %v646 = vrot.slane %v557, %v645
        %v647 = vmul.f32 %v548, %v642
        %v648 = vmul.f32 %v549, %v646
        %v651 = vrot.slane %v548, 4
        %v652 = vrot.slane %v549, 4
        %v655 = vsel %vm570, %v651, 0.0
        %v656 = vrot.slane %v655, 4
        %v657 = vadd.f32 %v655, %v656
        %v658 = vrot.slane %v657, 2
        %v659 = vadd.f32 %v657, %v658
        %v660 = vrot.slane %v659, 1
        %v661 = vadd.f32 %v659, %v660
        %v662 = vsel %vm570, %v652, 0.0
        %v663 = vrot.slane %v662, 4
        %v664 = vadd.f32 %v662, %v663
        %v665 = vrot.slane %v664, 2
        %v666 = vadd.f32 %v664, %v665
        %v667 = vrot.slane %v666, 1
        %v668 = vadd.f32 %v666, %v667
        %v669 = vlaneseq
        %v670 = vshrl.u32 %v669, 7
        %v671 = vsub.s32 4, %v670
        %v672 = vrot.slane %v556, %v671
        %v673 = vlaneseq
        %v674 = vshrl.u32 %v673, 7
        %v675 = vsub.s32 4, %v674
        %v676 = vrot.slane %v557, %v675
        %v677 = vmul.f32 %v550, %v672
        %v678 = vmul.f32 %v551, %v676
        %v679 = vsel %vm570, %v550, 0.0
        %v680 = vrot.slane %v679, 4
        %v681 = vadd.f32 %v679, %v680
        %v682 = vrot.slane %v681, 2
        %v683 = vadd.f32 %v681, %v682
        %v684 = vrot.slane %v683, 1
        %v685 = vadd.f32 %v683, %v684
        %v686 = vsel %vm570, %v551, 0.0
        %v687 = vrot.slane %v686, 4
        %v688 = vadd.f32 %v686, %v687
        %v689 = vrot.slane %v688, 2
        %v690 = vadd.f32 %v688, %v689
        %v691 = vrot.slane %v690, 1
        %v692 = vadd.f32 %v690, %v691
        %v693 = vlaneseq
        %v694 = vshrl.u32 %v693, 7
        %v695 = vsub.s32 5, %v694
        %v696 = vrot.slane %v556, %v695
        %v697 = vlaneseq
        %v698 = vshrl.u32 %v697, 7
        %v699 = vsub.s32 5, %v698
        %v700 = vrot.slane %v557, %v699
        %v701 = vmul.f32 %v550, %v696
        %v702 = vmul.f32 %v551, %v700
        %v705 = vrot.slane %v550, 4
        %v706 = vrot.slane %v551, 4
        %v709 = vsel %vm570, %v705, 0.0
        %v710 = vrot.slane %v709, 4
        %v711 = vadd.f32 %v709, %v710
        %v712 = vrot.slane %v711, 2
        %v713 = vadd.f32 %v711, %v712
        %v714 = vrot.slane %v713, 1
        %v715 = vadd.f32 %v713, %v714
        %v716 = vsel %vm570, %v706, 0.0
        %v717 = vrot.slane %v716, 4
        %v718 = vadd.f32 %v716, %v717
        %v719 = vrot.slane %v718, 2
        %v720 = vadd.f32 %v718, %v719
        %v721 = vrot.slane %v720, 1
        %v722 = vadd.f32 %v720, %v721
        %v723 = vlaneseq
        %v724 = vshrl.u32 %v723, 7
        %v725 = vsub.s32 6, %v724
        %v726 = vrot.slane %v556, %v725
        %v727 = vlaneseq
        %v728 = vshrl.u32 %v727, 7
        %v729 = vsub.s32 6, %v728
        %v730 = vrot.slane %v557, %v729
        %v731 = vmul.f32 %v552, %v726
        %v732 = vmul.f32 %v553, %v730
        %v733 = vsel %vm570, %v552, 0.0
        %v734 = vrot.slane %v733, 4
        %v735 = vadd.f32 %v733, %v734
        %v736 = vrot.slane %v735, 2
        %v737 = vadd.f32 %v735, %v736
        %v738 = vrot.slane %v737, 1
        %v739 = vadd.f32 %v737, %v738
        %v740 = vsel %vm570, %v553, 0.0
        %v741 = vrot.slane %v740, 4
        %v742 = vadd.f32 %v740, %v741
        %v743 = vrot.slane %v742, 2
        %v744 = vadd.f32 %v742, %v743
        %v745 = vrot.slane %v744, 1
        %v746 = vadd.f32 %v744, %v745
        %v747 = vlaneseq
        %v748 = vshrl.u32 %v747, 7
        %v749 = vsub.s32 7, %v748
        %v750 = vrot.slane %v556, %v749
        %v751 = vlaneseq
        %v752 = vshrl.u32 %v751, 7
        %v753 = vsub.s32 7, %v752
        %v754 = vrot.slane %v557, %v753
        %v755 = vmul.f32 %v552, %v750
        %v756 = vmul.f32 %v553, %v754
        %v759 = vrot.slane %v552, 4
        %v760 = vrot.slane %v553, 4
        %v763 = vsel %vm570, %v759, 0.0
        %v764 = vrot.slane %v763, 4
        %v765 = vadd.f32 %v763, %v764
        %v766 = vrot.slane %v765, 2
        %v767 = vadd.f32 %v765, %v766
        %v768 = vrot.slane %v767, 1
        %v769 = vadd.f32 %v767, %v768
        %v770 = vsel %vm570, %v760, 0.0
        %v771 = vrot.slane %v770, 4
        %v772 = vadd.f32 %v770, %v771
        %v773 = vrot.slane %v772, 2
        %v774 = vadd.f32 %v772, %v773
        %v775 = vrot.slane %v774, 1
        %v776 = vadd.f32 %v774, %v775
        %v777 = vlaneseq
        %v778 = vshrl.u32 %v777, 7
        %v779 = vsub.s32 0, %v778
        %v780 = vrot.slane %v558, %v779
        %v781 = vlaneseq
        %v782 = vshrl.u32 %v781, 7
        %v783 = vsub.s32 0, %v782
        %v784 = vrot.slane %v559, %v783
        %v785 = vmul.f32 %v554, %v780
        %v786 = vmul.f32 %v555, %v784
        %v787 = vsel %vm570, %v554, 0.0
        %v788 = vrot.slane %v787, 4
        %v789 = vadd.f32 %v787, %v788
        %v790 = vrot.slane %v789, 2
        %v791 = vadd.f32 %v789, %v790
        %v792 = vrot.slane %v791, 1
        %v793 = vadd.f32 %v791, %v792
        %v794 = vsel %vm570, %v555, 0.0
        %v795 = vrot.slane %v794, 4
        %v796 = vadd.f32 %v794, %v795
        %v797 = vrot.slane %v796, 2
        %v798 = vadd.f32 %v796, %v797
        %v799 = vrot.slane %v798, 1
        %v800 = vadd.f32 %v798, %v799
        %v803 = vrot.slane %v593, 4
        %v804 = vrot.slane %v594, 4
        %v807 = vadd.f32 %v568, %v803
        %v808 = vadd.f32 %v569, %v804
        %v811 = vrot.slane %v647, 4
        %v812 = vrot.slane %v648, 4
        %v815 = vadd.f32 %v623, %v811
        %v816 = vadd.f32 %v624, %v812
        %v819 = vrot.slane %v701, 4
        %v820 = vrot.slane %v702, 4
        %v823 = vadd.f32 %v677, %v819
        %v824 = vadd.f32 %v678, %v820
        %v827 = vrot.slane %v755, 4
        %v828 = vrot.slane %v756, 4
        %v831 = vadd.f32 %v731, %v827
        %v832 = vadd.f32 %v732, %v828
        %v833 = vadd.f32 %v807, %v815
        %v834 = vadd.f32 %v808, %v816
        %v835 = vadd.f32 %v823, %v831
        %v836 = vadd.f32 %v824, %v832
        %v837 = vadd.f32 %v833, %v835
        %v838 = vadd.f32 %v834, %v836
        %v839 = vadd.f32 %v837, %v785
        %v840 = vadd.f32 %v838, %v786
        %v841 = vld [vmem:[%s354] sm:$0xff]
        %v844 = vcombine.low %v839, %v840
        %v846 = vadd.f32 %v841, %v844
        %847 = vst [vmem:[%s324] sm:$0xff] %v846
        %vm848 = vcmask 1040384
        %v849 = vsel %vm848, %v577, %v607
        %v850 = vsel %vm848, %v584, %v614
        %vm851 = vcmask 1041408
        %v852 = vsel %vm851, %v849, %v631
        %v853 = vsel %vm851, %v850, %v638
        %v854 = vsel %vm478, %v852, %v661
        %v855 = vsel %vm478, %v853, %v668
        %v856 = vsel %vm570, %v854, %v685
        %v857 = vsel %vm570, %v855, %v692
        %vm858 = vcmask 1044480
        %v859 = vsel %vm858, %v856, %v715
        %v860 = vsel %vm858, %v857, %v722
        %vm861 = vcmask 1045504
        %v862 = vsel %vm861, %v859, %v739
        %v863 = vsel %vm861, %v860, %v746
        %vm864 = vcmask 1046528
        %v865 = vsel %vm864, %v862, %v769
        %v866 = vsel %vm864, %v863, %v776
        %v867 = vmul.f32 %v865, 0.25
        %v868 = vmul.f32 %v866, 0.25
        %v869 = vmul.f32 %v793, 0.25
        %v870 = vmul.f32 %v800, 0.25
        %871 = vst [vmem:[%s375] sm:$0xff] %v867
        %872 = vst [vmem:[%s375 + $0x8] sm:$0xff] %v868
        %873 = vst [vmem:[%s375 + $0x10] sm:$0x1] %v869
        %874 = vst [vmem:[%s375 + $0x18] sm:$0x1] %v870
        %s875 = sand.u32 %s169, 1
        %s876 = scalar_lea.sflag [#allocation3], %s875
        %s877 = sand.u32 %s169, 1
        %s878 = smul.addr %s877, 8
        %s879 = scalar_lea.vmem [#allocation2], %s878
        %s880 = smul.u32 2, %s26
        %p881 = scmp.lt.s32.totalorder %s25, 1
        %s882 = scalar_select %p881, %s25, 1
        %p883 = scmp.lt.s32.totalorder %s880, 1
        %s884 = scalar_select %p883, %s880, 1
        %s885 = smul.addr %s882, 4
        %s886 = sadd.s32 %s884, %s885
        %s887 = smul.addr %s886, 8
        %s888 = scalar_lea.vmem %s6, %s887
        // Predicated region
        $region41: #{tpu_custom_call.1} parent=39 // pred_check
          %p889 = pneg %p179
        $region42: #{tpu_custom_call.1} parent=39 // pred_check_branch
          %891 = sbr.rel (%p889) target = $region44
        $region43: #{tpu_custom_call.1} parent=39 // pred_region
          %s892 = smul.u32 2, %s26
          %s894 = ssub.s32 128, 128
          %895 = vsyncadd %s876, %s894
          %s896 = smul.addr %s25, 2
          %s897 = sadd.s32 %s892, %s896
          %s898 = smul.addr %s897, 64
          %s899 = scalar_lea.hbm %s5, %s898
          %s901 = sshll.u32 %s879, 4
          %s902 = int_to_ptr.vmem [resolvable:$true] %s901
          %904 = dma.vmem_to_hbm [thread:$0]  %s902, 128, %s899, %s876
        $region44: #{tpu_custom_call.1} parent=39 // pred_fallthru
          _
        // Predicated region
        $region45: #{tpu_custom_call.1} parent=39 // pred_check
          %p905 = pneg %p207
        $region46: #{tpu_custom_call.1} parent=39 // pred_check_branch
          %907 = sbr.rel (%p905) target = $region48
        $region47: #{tpu_custom_call.1} parent=39 // pred_region
          %s908 = smul.u32 2, %s26
        $region48: #{tpu_custom_call.1} parent=39 // pred_fallthru
          _
      $region40: #{tpu_custom_call.1} parent=5 // pred_fallthru
        _
      %p909 = scmp.le.s32.totalorder 2, %s16
      // Predicated region
      $region49: #{tpu_custom_call.1} parent=5 // pred_check
        %p910 = pneg %p909
      $region50: #{tpu_custom_call.1} parent=5 // pred_check_branch
        %912 = sbr.rel (%p910) target = $region52
      $region51: #{tpu_custom_call.1} parent=5 // pred_region
        %s913 = ssub.s32 %s16, 2
        // Predicated region
        $region53: #{tpu_custom_call.1} parent=51 // pred_check
          %p914 = pneg %p185
        $region54: #{tpu_custom_call.1} parent=51 // pred_check_branch
          %916 = sbr.rel (%p914) target = $region56
        $region55: #{tpu_custom_call.1} parent=51 // pred_region
          %s917 = sand.u32 %s170, 1
          %s918 = scalar_lea.sflag [#allocation3], %s917
          %s919 = sand.u32 %s170, 1
          %s920 = smul.addr %s919, 8
          %s921 = scalar_lea.vmem [#allocation2], %s920
          %922 = dma.done %s918, 128
        $region56: #{tpu_custom_call.1} parent=51 // pred_fallthru
          _
        // Predicated region
        $region57: #{tpu_custom_call.1} parent=51 // pred_check
          %p923 = pneg %p213
        $region58: #{tpu_custom_call.1} parent=51 // pred_check_branch
          %925 = sbr.rel (%p923) target = $region60
        $region59: #{tpu_custom_call.1} parent=51 // pred_region
          %s926 = smul.u32 2, %s28
          %p927 = scmp.lt.s32.totalorder %s27, 1
          %s928 = scalar_select %p927, %s27, 1
          %p929 = scmp.lt.s32.totalorder %s926, 1
          %s930 = scalar_select %p929, %s926, 1
          %s931 = smul.addr %s928, 4
          %s932 = sadd.s32 %s930, %s931
          %s933 = smul.addr %s932, 8
          %s934 = scalar_lea.vmem %s6, %s933
        $region60: #{tpu_custom_call.1} parent=51 // pred_fallthru
          _
      $region52: #{tpu_custom_call.1} parent=5 // pred_fallthru
        _
    $region6: #{tpu_custom_call.1} parent=1 // loop_footer
      %s20 = sadd.s32 1, %s16
    $region7: #{tpu_custom_call.1} parent=1 // loop_footer_branch
      %15 = sbr.rel target = $region3
    $region8: #{tpu_custom_call.1} parent=1 // loop_exit
      _
    %935 = vsyncpa [#allocation3], 1
    %s936 = scalar_lea.sflag [#allocation3], 1
    %937 = vsyncpa %s936, 1

// kernel: tpu_custom_call.1
$region0: #{tpu_custom_call.1}
  #allocation0 [shape = 'u32[]', space=smem, size = 0x4, offset = 0x4, fixed_abs, tag = 'smem constant byte address 0x4 - core index']
  #allocation1 [shape = 'u32[144,128]{1,0:T(1,128)}', space=vmem, size = 0x12000, scoped, tag = 'internal scratch']
  %s0 = inlined_call_operand.vmem [shape: bf16[2,54,256], index: 0, kind: input, shape index: {}]
  %s1 = inlined_call_operand.vmem [shape: f32[2,4,256], index: 1, kind: input, shape index: {}]
  %s2 = inlined_call_operand.vmem [shape: bf16[36,54], index: 2, kind: input, shape index: {}]
  %s3 = inlined_call_operand.vmem [shape: f32[36,1], index: 3, kind: input, shape index: {}]
  %s4 = inlined_call_operand.vmem [shape: f32[2,9,256], index: 4, kind: input, shape index: {}]
  %s5 = inlined_call_operand.hbm [shape: f32[2,4,256], index: 5, kind: output, shape index: {0}]
  %s6 = inlined_call_operand.vmem [shape: f32[2,9,256], index: 6, kind: output, shape index: {1}]
  %7 = xla_tuple %s5, %s6
  %s8 = sld [smem:[#allocation0]]
  $region61: #{tpu_custom_call.1} parent=0
    _
  %s10 = ssub.s32 1, %s8
  %s11 = scalar_select 0, %s10, %s8
  $region1: #{tpu_custom_call.1} parent=0
    #allocation2 [shape = 'u8[8192]{0}', space=vmem, size = 0x2000, scoped, tag = 'output window, operand 0']
    #allocation3 [shape = 's32[2]{0}', space=sflag, size = 0x8, scoped, tag = 'scoped memory for tpu_custom_call.1']
    %12 = vsyncpa [#allocation3], 0
    %s13 = scalar_lea.sflag [#allocation3], 1
    %14 = vsyncpa %s13, 0
    loop: start=0, step=1, limit=4
    $region2: #{tpu_custom_call.1} parent=1 // loop_pre_header
      _
    $region3: #{tpu_custom_call.1} parent=1 // loop_header
      %s16 = sphi 0, %s20
      %p17 = scmp.ge.s32.totalorder %s16, 4
      %s23 = sphi 0, %s35
      %s24 = sphi 0, %s31
      %s25 = sphi 0, %s23
      %s26 = sphi 0, %s24
      %s27 = sphi 0, %s25
      %s28 = sphi 0, %s26
      %s40 = sphi 0, %s42
      %s43 = sphi 0, %s40
      %s44 = sphi 0, %s43
      %s60 = sphi 0, %s44
      %s68 = sphi 0, %s70
      %s71 = sphi 0, %s68
      %s72 = sphi 0, %s71
      %s88 = sphi 0, %s72
      %s92 = sphi 0, %s92
      %s94 = sphi 0, %s92
      %s95 = sphi 0, %s94
      %s109 = sphi 0, %s95
      %s113 = sphi 0, %s113
      %s115 = sphi 0, %s113
      %s116 = sphi 0, %s115
      %s130 = sphi 0, %s116
      %s138 = sphi 0, %s140
      %s141 = sphi 0, %s138
      %s142 = sphi 0, %s141
      %s158 = sphi 0, %s142
      %s166 = sphi 0, %s168
      %s169 = sphi 0, %s166
      %s170 = sphi 0, %s169
      %s186 = sphi 0, %s170
      %s194 = sphi 0, %s196
      %s197 = sphi 0, %s194
      %s198 = sphi 0, %s197
      %s214 = sphi 0, %s198
    $region4: #{tpu_custom_call.1} parent=1 // loop_header_branch
      %19 = sbr.rel (%p17) target = $region8
    $region5: #{tpu_custom_call.1} parent=1 // loop_body
      %s21 = ssub.s32 %s16, 1
      %s22 = ssub.s32 %s16, 2
      %s29 = sadd.s32 1, %s24
      %p30 = scmp.ge.s32.totalorder %s29, 1
      %s31 = scalar_select %p30, 0, %s29
      %s32 = sadd.s32 1, %s23
      %s33 = scalar_select %p30, %s32, %s23
      %p34 = scmp.ge.s32.totalorder %s33, 2
      %s35 = scalar_select %p34, 0, %s33
      %s36 = ssub.s32 %s23, %s35
      %s37 = ssub.s32 %s24, %s31
      %s38 = sor.u32 %s36, %s37
      %p39 = scmp.eq.s32.totalorder %s38, 0
      %s41 = sadd.s32 %s40, 1
      %s42 = scalar_select %p39, %s40, %s41
      %p45 = pneg %p39
      %p46 = scmp.eq.s32.totalorder %s16, 1
      %p47 = por %p45, %p46
      %p48 = scmp.ne.s32.totalorder %s40, %s43
      %p49 = scmp.eq.s32.totalorder %s16, 0
      %p50 = por %p48, %p49
      %p51 = scmp.ne.s32.totalorder %s40, %s43
      %p52 = scmp.eq.s32.totalorder %s21, 1
      %p53 = por %p51, %p52
      %p54 = scmp.ne.s32.totalorder %s43, %s44
      %p55 = scmp.eq.s32.totalorder %s21, 0
      %p56 = por %p54, %p55
      %p57 = scmp.ne.s32.totalorder %s43, %s44
      %p58 = scmp.eq.s32.totalorder %s22, 1
      %p59 = por %p57, %p58
      %p61 = scmp.ne.s32.totalorder %s44, %s60
      %p62 = scmp.eq.s32.totalorder %s22, 0
      %p63 = por %p61, %p62
      %s64 = ssub.s32 %s23, %s35
      %s65 = ssub.s32 %s24, %s31
      %s66 = sor.u32 %s64, %s65
      %p67 = scmp.eq.s32.totalorder %s66, 0
      %s69 = sadd.s32 %s68, 1
      %s70 = scalar_select %p67, %s68, %s69
      %p73 = pneg %p67
      %p74 = scmp.eq.s32.totalorder %s16, 1
      %p75 = por %p73, %p74
      %p76 = scmp.ne.s32.totalorder %s68, %s71
      %p77 = scmp.eq.s32.totalorder %s16, 0
      %p78 = por %p76, %p77
      %p79 = scmp.ne.s32.totalorder %s68, %s71
      %p80 = scmp.eq.s32.totalorder %s21, 1
      %p81 = por %p79, %p80
      %p82 = scmp.ne.s32.totalorder %s71, %s72
      %p83 = scmp.eq.s32.totalorder %s21, 0
      %p84 = por %p82, %p83
      %p85 = scmp.ne.s32.totalorder %s71, %s72
      %p86 = scmp.eq.s32.totalorder %s22, 1
      %p87 = por %p85, %p86
      %p89 = scmp.ne.s32.totalorder %s72, %s88
      %p90 = scmp.eq.s32.totalorder %s22, 0
      %p91 = por %p89, %p90
      %s93 = sadd.s32 %s92, 1
      %p96 = scmp.eq.s32.totalorder %s16, 1
      %p97 = scmp.ne.s32.totalorder %s92, %s94
      %p98 = scmp.eq.s32.totalorder %s16, 0
      %p99 = por %p97, %p98
      %p100 = scmp.ne.s32.totalorder %s92, %s94
      %p101 = scmp.eq.s32.totalorder %s21, 1
      %p102 = por %p100, %p101
      %p103 = scmp.ne.s32.totalorder %s94, %s95
      %p104 = scmp.eq.s32.totalorder %s21, 0
      %p105 = por %p103, %p104
      %p106 = scmp.ne.s32.totalorder %s94, %s95
      %p107 = scmp.eq.s32.totalorder %s22, 1
      %p108 = por %p106, %p107
      %p110 = scmp.ne.s32.totalorder %s95, %s109
      %p111 = scmp.eq.s32.totalorder %s22, 0
      %p112 = por %p110, %p111
      %s114 = sadd.s32 %s113, 1
      %p117 = scmp.eq.s32.totalorder %s16, 1
      %p118 = scmp.ne.s32.totalorder %s113, %s115
      %p119 = scmp.eq.s32.totalorder %s16, 0
      %p120 = por %p118, %p119
      %p121 = scmp.ne.s32.totalorder %s113, %s115
      %p122 = scmp.eq.s32.totalorder %s21, 1
      %p123 = por %p121, %p122
      %p124 = scmp.ne.s32.totalorder %s115, %s116
      %p125 = scmp.eq.s32.totalorder %s21, 0
      %p126 = por %p124, %p125
      %p127 = scmp.ne.s32.totalorder %s115, %s116
      %p128 = scmp.eq.s32.totalorder %s22, 1
      %p129 = por %p127, %p128
      %p131 = scmp.ne.s32.totalorder %s116, %s130
      %p132 = scmp.eq.s32.totalorder %s22, 0
      %p133 = por %p131, %p132
      %s134 = ssub.s32 %s23, %s35
      %s135 = ssub.s32 %s24, %s31
      %s136 = sor.u32 %s134, %s135
      %p137 = scmp.eq.s32.totalorder %s136, 0
      %s139 = sadd.s32 %s138, 1
      %s140 = scalar_select %p137, %s138, %s139
      %p143 = pneg %p137
      %p144 = scmp.eq.s32.totalorder %s16, 1
      %p145 = por %p143, %p144
      %p146 = scmp.ne.s32.totalorder %s138, %s141
      %p147 = scmp.eq.s32.totalorder %s16, 0
      %p148 = por %p146, %p147
      %p149 = scmp.ne.s32.totalorder %s138, %s141
      %p150 = scmp.eq.s32.totalorder %s21, 1
      %p151 = por %p149, %p150
      %p152 = scmp.ne.s32.totalorder %s141, %s142
      %p153 = scmp.eq.s32.totalorder %s21, 0
      %p154 = por %p152, %p153
      %p155 = scmp.ne.s32.totalorder %s141, %s142
      %p156 = scmp.eq.s32.totalorder %s22, 1
      %p157 = por %p155, %p156
      %p159 = scmp.ne.s32.totalorder %s142, %s158
      %p160 = scmp.eq.s32.totalorder %s22, 0
      %p161 = por %p159, %p160
      %s162 = ssub.s32 %s23, %s35
      %s163 = ssub.s32 %s24, %s31
      %s164 = sor.u32 %s162, %s163
      %p165 = scmp.eq.s32.totalorder %s164, 0
      %s167 = sadd.s32 %s166, 1
      %s168 = scalar_select %p165, %s166, %s167
      %p171 = pneg %p165
      %p172 = scmp.eq.s32.totalorder %s16, 1
      %p173 = por %p171, %p172
      %p174 = scmp.ne.s32.totalorder %s166, %s169
      %p175 = scmp.eq.s32.totalorder %s16, 0
      %p176 = por %p174, %p175
      %p177 = scmp.ne.s32.totalorder %s166, %s169
      %p178 = scmp.eq.s32.totalorder %s21, 1
      %p179 = por %p177, %p178
      %p180 = scmp.ne.s32.totalorder %s169, %s170
      %p181 = scmp.eq.s32.totalorder %s21, 0
      %p182 = por %p180, %p181
      %p183 = scmp.ne.s32.totalorder %s169, %s170
      %p184 = scmp.eq.s32.totalorder %s22, 1
      %p185 = por %p183, %p184
      %p187 = scmp.ne.s32.totalorder %s170, %s186
      %p188 = scmp.eq.s32.totalorder %s22, 0
      %p189 = por %p187, %p188
      %s190 = ssub.s32 %s23, %s35
      %s191 = ssub.s32 %s24, %s31
      %s192 = sor.u32 %s190, %s191
      %p193 = scmp.eq.s32.totalorder %s192, 0
      %s195 = sadd.s32 %s194, 1
      %s196 = scalar_select %p193, %s194, %s195
      %p199 = pneg %p193
      %p200 = scmp.eq.s32.totalorder %s16, 1
      %p201 = por %p199, %p200
      %p202 = scmp.ne.s32.totalorder %s194, %s197
      %p203 = scmp.eq.s32.totalorder %s16, 0
      %p204 = por %p202, %p203
      %p205 = scmp.ne.s32.totalorder %s194, %s197
      %p206 = scmp.eq.s32.totalorder %s21, 1
      %p207 = por %p205, %p206
      %p208 = scmp.ne.s32.totalorder %s197, %s198
      %p209 = scmp.eq.s32.totalorder %s21, 0
      %p210 = por %p208, %p209
      %p211 = scmp.ne.s32.totalorder %s197, %s198
      %p212 = scmp.eq.s32.totalorder %s22, 1
      %p213 = por %p211, %p212
      %p215 = scmp.ne.s32.totalorder %s198, %s214
      %p216 = scmp.eq.s32.totalorder %s22, 0
      %p217 = por %p215, %p216
      %p218 = scmp.le.s32.totalorder 1, %s16
      %p219 = scmp.lt.s32.totalorder %s16, 3
      %p220 = pnand %p218, %p219
      %p221 = pneg %p220
      // Predicated region
      $region9: #{tpu_custom_call.1} parent=5 // pred_check
        _
      $region10: #{tpu_custom_call.1} parent=5 // pred_check_branch
        %223 = sbr.rel (%p220) target = $region12
      $region11: #{tpu_custom_call.1} parent=5 // pred_region
        %s224 = ssub.s32 %s16, 1
        // Predicated region
        $region13: #{tpu_custom_call.1} parent=11 // pred_check
          %p225 = pneg %p105
        $region14: #{tpu_custom_call.1} parent=11 // pred_check_branch
          %227 = sbr.rel (%p225) target = $region16
        $region15: #{tpu_custom_call.1} parent=11 // pred_region
          _
        $region16: #{tpu_custom_call.1} parent=11 // pred_fallthru
          _
        // Predicated region
        $region17: #{tpu_custom_call.1} parent=11 // pred_check
          %p228 = pneg %p126
        $region18: #{tpu_custom_call.1} parent=11 // pred_check_branch
          %230 = sbr.rel (%p228) target = $region20
        $region19: #{tpu_custom_call.1} parent=11 // pred_region
          _
        $region20: #{tpu_custom_call.1} parent=11 // pred_fallthru
          _
      $region12: #{tpu_custom_call.1} parent=5 // pred_fallthru
        _
      %p231 = scmp.lt.s32.totalorder %s16, 2
      // Predicated region
      $region21: #{tpu_custom_call.1} parent=5 // pred_check
        %p232 = pneg %p231
      $region22: #{tpu_custom_call.1} parent=5 // pred_check_branch
        %234 = sbr.rel (%p232) target = $region24
      $region23: #{tpu_custom_call.1} parent=5 // pred_region
        // Predicated region
        $region25: #{tpu_custom_call.1} parent=23 // pred_check
          %p235 = pneg %p50
        $region26: #{tpu_custom_call.1} parent=23 // pred_check_branch
          %237 = sbr.rel (%p235) target = $region28
        $region27: #{tpu_custom_call.1} parent=23 // pred_region
          %s238 = smul.u32 2, %s24
          %p239 = scmp.lt.s32.totalorder %s23, 1
          %s240 = scalar_select %p239, %s23, 1
          %p241 = scmp.lt.s32.totalorder %s238, 1
          %s242 = scalar_select %p241, %s238, 1
          %s243 = smul.addr %s240, 14
          %s244 = sadd.s32 %s242, %s243
          %s245 = smul.addr %s244, 4
          %s246 = scalar_lea.vmem %s0, %s245
          %s247 = smul.u32 2, %s24
        $region28: #{tpu_custom_call.1} parent=23 // pred_fallthru
          _
        // Predicated region
        $region29: #{tpu_custom_call.1} parent=23 // pred_check
          %p248 = pneg %p78
        $region30: #{tpu_custom_call.1} parent=23 // pred_check_branch
          %250 = sbr.rel (%p248) target = $region32
        $region31: #{tpu_custom_call.1} parent=23 // pred_region
          %s251 = smul.u32 2, %s24
          %p252 = scmp.lt.s32.totalorder %s23, 1
          %s253 = scalar_select %p252, %s23, 1
          %p254 = scmp.lt.s32.totalorder %s251, 1
          %s255 = scalar_select %p254, %s251, 1
          %s256 = smul.addr %s253, 2
          %s257 = sadd.s32 %s255, %s256
          %s258 = smul.addr %s257, 4
          %s259 = scalar_lea.vmem %s1, %s258
          %s260 = smul.u32 2, %s24
        $region32: #{tpu_custom_call.1} parent=23 // pred_fallthru
          _
        // Predicated region
        $region33: #{tpu_custom_call.1} parent=23 // pred_check
          %p261 = pneg %p148
        $region34: #{tpu_custom_call.1} parent=23 // pred_check_branch
          %263 = sbr.rel (%p261) target = $region36
        $region35: #{tpu_custom_call.1} parent=23 // pred_region
          %s264 = smul.u32 2, %s24
          %p265 = scmp.lt.s32.totalorder %s23, 1
          %s266 = scalar_select %p265, %s23, 1
          %p267 = scmp.lt.s32.totalorder %s264, 1
          %s268 = scalar_select %p267, %s264, 1
          %s269 = smul.addr %s266, 4
          %s270 = sadd.s32 %s268, %s269
          %s271 = smul.addr %s270, 8
          %s272 = scalar_lea.vmem %s4, %s271
          %s273 = smul.u32 2, %s24
        $region36: #{tpu_custom_call.1} parent=23 // pred_fallthru
          _
      $region24: #{tpu_custom_call.1} parent=5 // pred_fallthru
        _
      %p274 = scmp.le.s32.totalorder 1, %s16
      %p275 = scmp.lt.s32.totalorder %s16, 3
      %p276 = pnand %p274, %p275
      %p277 = pneg %p276
      // Predicated region
      $region37: #{tpu_custom_call.1} parent=5 // pred_check
        _
      $region38: #{tpu_custom_call.1} parent=5 // pred_check_branch
        %279 = sbr.rel (%p276) target = $region40
      $region39: #{tpu_custom_call.1} parent=5 // pred_region
        %s280 = ssub.s32 %s16, 1
        %s281 = smul.u32 2, %s26
        %p282 = scmp.lt.s32.totalorder %s25, 1
        %s283 = scalar_select %p282, %s25, 1
        %p284 = scmp.lt.s32.totalorder %s281, 1
        %s285 = scalar_select %p284, %s281, 1
        %s286 = smul.addr %s283, 14
        %s287 = sadd.s32 %s285, %s286
        %s288 = smul.addr %s287, 4
        %s289 = scalar_lea.vmem %s0, %s288
        %p290 = pneg %p56
        %p291 = pneg %p53
        %s292 = smul.u32 2, %s26
        %p293 = scmp.lt.s32.totalorder %s25, 1
        %s294 = scalar_select %p293, %s25, 1
        %p295 = scmp.lt.s32.totalorder %s292, 1
        %s296 = scalar_select %p295, %s292, 1
        %s297 = smul.addr %s294, 2
        %s298 = sadd.s32 %s296, %s297
        %s299 = smul.addr %s298, 4
        %s300 = scalar_lea.vmem %s1, %s299
        %p301 = pneg %p84
        %p302 = pneg %p81
        %p303 = pneg %p105
        %p304 = pneg %p102
        %p305 = pneg %p126
        %p306 = pneg %p123
        %s307 = smul.u32 2, %s26
        %p308 = scmp.lt.s32.totalorder %s25, 1
        %s309 = scalar_select %p308, %s25, 1
        %p310 = scmp.lt.s32.totalorder %s307, 1
        %s311 = scalar_select %p310, %s307, 1
        %s312 = smul.addr %s309, 4
        %s313 = sadd.s32 %s311, %s312
        %s314 = smul.addr %s313, 8
        %s315 = scalar_lea.vmem %s4, %s314
        %p316 = pneg %p154
        %p317 = pneg %p151
        %p318 = pneg %p182
        %p319 = pneg %p179
        %s320 = sand.u32 %s169, 1
        %s321 = scalar_lea.sflag [#allocation3], %s320
        %s322 = sand.u32 %s169, 1
        %s323 = smul.addr %s322, 8
        %s324 = scalar_lea.vmem [#allocation2], %s323
        %p325 = pneg %p210
        %p326 = pneg %p207
        %s327 = smul.u32 2, %s26
        %p328 = scmp.lt.s32.totalorder %s25, 1
        %s329 = scalar_select %p328, %s25, 1
        %p330 = scmp.lt.s32.totalorder %s327, 1
        %s331 = scalar_select %p330, %s327, 1
        %s332 = smul.addr %s329, 4
        %s333 = sadd.s32 %s331, %s332
        %s334 = smul.addr %s333, 8
        %s335 = scalar_lea.vmem %s6, %s334
        %s336 = smul.u32 2, %s26
        %p337 = scmp.lt.s32.totalorder %s25, 1
        %s338 = scalar_select %p337, %s25, 1
        %p339 = scmp.lt.s32.totalorder %s336, 1
        %s340 = scalar_select %p339, %s336, 1
        %s341 = smul.addr %s338, 14
        %s342 = sadd.s32 %s340, %s341
        %s343 = smul.addr %s342, 4
        %s344 = scalar_lea.vmem %s0, %s343
        %s345 = smul.u32 2, %s26
        %s346 = smul.u32 2, %s26
        %p347 = scmp.lt.s32.totalorder %s25, 1
        %s348 = scalar_select %p347, %s25, 1
        %p349 = scmp.lt.s32.totalorder %s346, 1
        %s350 = scalar_select %p349, %s346, 1
        %s351 = smul.addr %s348, 2
        %s352 = sadd.s32 %s350, %s351
        %s353 = smul.addr %s352, 4
        %s354 = scalar_lea.vmem %s1, %s353
        %s355 = smul.u32 2, %s26
        %s356 = smul.u32 2, %s26
        %p357 = scmp.lt.s32.totalorder %s25, 1
        %s358 = scalar_select %p357, %s25, 1
        %p359 = scmp.lt.s32.totalorder %s356, 1
        %s360 = scalar_select %p359, %s356, 1
        %s361 = smul.addr %s358, 4
        %s362 = sadd.s32 %s360, %s361
        %s363 = smul.addr %s362, 8
        %s364 = scalar_lea.vmem %s4, %s363
        %s365 = smul.u32 2, %s26
        %s366 = smul.u32 2, %s26
        %s367 = smul.u32 2, %s26
        %p368 = scmp.lt.s32.totalorder %s25, 1
        %s369 = scalar_select %p368, %s25, 1
        %p370 = scmp.lt.s32.totalorder %s367, 1
        %s371 = scalar_select %p370, %s367, 1
        %s372 = smul.addr %s369, 4
        %s373 = sadd.s32 %s371, %s372
        %s374 = smul.addr %s373, 8
        %s375 = scalar_lea.vmem %s6, %s374
        %s376 = smul.u32 2, %s26
        %v378 = vld [vmem:[%s344] sm:$0xff]
        %v379 = vld [vmem:[%s344 + $0x8] sm:$0xff]
        %v380 = vld [vmem:[%s344 + $0x10] sm:$0xff]
        %v381 = vld [vmem:[%s344 + $0x18] sm:$0xff]
        %v382 = vld [vmem:[%s344 + $0x20] sm:$0xff]
        %v383 = vld [vmem:[%s344 + $0x28] sm:$0xff]
        %v384 = vld [vmem:[%s344 + $0x30] sm:$0x77]
        %v385 = vld [vmem:[%s2] sm:$0xf]
        %v386 = vld [vmem:[%s2 + $0x4] sm:$0xf]
        %v387 = vld [vmem:[%s2 + $0x8] sm:$0xf]
        %v388 = vld [vmem:[%s2 + $0xc] sm:$0xf]
        %v389 = vld [vmem:[%s2 + $0x10] sm:$0x3]
        %v390 = vld [vmem:[%s3] sm:$0xff]
        %v391 = vld [vmem:[%s3 + $0x8] sm:$0xff]
        %v392 = vld [vmem:[%s3 + $0x10] sm:$0xff]
        %v393 = vld [vmem:[%s3 + $0x18] sm:$0xff]
        %v394 = vld [vmem:[%s3 + $0x20] sm:$0xf]
        %396 = vset.pattern.permute.xlu0 0
        %397 = vperm.xlu0 %396, %v390
        %v398 = vpop.permute.xlu0 %397
        %401 = vset.pattern.permute.xlu0 0
        %402 = vperm.xlu0 %401, %v391
        %v403 = vpop.permute.xlu0 %402
        %406 = vset.pattern.permute.xlu0 0
        %407 = vperm.xlu0 %406, %v392
        %v408 = vpop.permute.xlu0 %407
        %411 = vset.pattern.permute.xlu0 0
        %412 = vperm.xlu0 %411, %v393
        %v413 = vpop.permute.xlu0 %412
        %416 = vset.pattern.permute.xlu0 0
        %417 = vperm.xlu0 %416, %v394
        %v418 = vpop.permute.xlu0 %417
        %v425 = vunpack.c.l.b16 %v385
        %v426 = vunpack.c.l.b16 %v386
        %v427 = vunpack.c.l.b16 %v387
        %v428 = vunpack.c.l.b16 %v388
        %v429 = vunpack.c.l.b16 %v389
        %v430 = vpack.c.b16 %v426, %v425
        %v431 = vpack.c.b16 %v428, %v427
        %v432 = vpack.c.b16 %v429, %v429
        %v440 = vunpack.c.l.b16 %v378
        %v441 = vunpack.c.h.b16 %v378
        %v442 = vunpack.c.l.b16 %v379
        %v443 = vunpack.c.h.b16 %v379
        %v444 = vunpack.c.l.b16 %v380
        %v445 = vunpack.c.h.b16 %v380
        %v446 = vunpack.c.l.b16 %v381
        %v447 = vunpack.c.h.b16 %v381
        %v448 = vunpack.c.l.b16 %v382
        %v449 = vunpack.c.h.b16 %v382
        %v450 = vunpack.c.l.b16 %v383
        %v451 = vunpack.c.h.b16 %v383
        %v452 = vunpack.c.l.b16 %v384
        %v453 = vunpack.c.h.b16 %v384
        %v454 = vpack.c.b16 %v442, %v440
        %v455 = vpack.c.b16 %v443, %v441
        %v456 = vpack.c.b16 %v446, %v444
        %v457 = vpack.c.b16 %v447, %v445
        %v458 = vpack.c.b16 %v450, %v448
        %v459 = vpack.c.b16 %v451, %v449
        %v460 = vpack.c.b16 %v452, %v452
        %v461 = vpack.c.b16 %v453, %v453
        %vm468 = vcmask 441344
        %v470 = vsel %vm468, %v430, 0
        %v473 = vsel %vm468, %v431, 0
        %v476 = vsel %vm468, %v432, 0
        %vm478 = vcmask 1042432
        %v480 = vsel %vm478, %v460, 0
        %v483 = vsel %vm478, %v461, 0
        %485 = vmatprep.subr.bf16.mxu0 0
        %486 = vmatpush1.bf16.msra.mxu0 0
        %487 = vmatprep.subr.bf16.mxu0 0
        %488 = vmatpush1.bf16.msra.mxu0 0
        %489 = vmatprep.subr.bf16.mxu0 0
        %490 = vmatpush1.bf16.msra.mxu0 0
        %491 = vmatprep.subr.bf16.mxu0 0
        %492 = vmatpush1.bf16.msra.mxu0 0
        %493 = vmatprep.subr.bf16.mxu0 %v483
        %494 = vmatpush1.bf16.msra.mxu0 %v480
        %495 = vmatprep.subr.bf16.mxu0 %v459
        %496 = vmatpush1.bf16.msra.mxu0 %v458
        %497 = vmatprep.subr.bf16.mxu0 %v457
        %498 = vmatpush1.bf16.msra.mxu0 %v456
        %499 = vmatprep.subr.bf16.mxu0 %v455
        %500 = vmatpush1.bf16.msra.mxu0 %v454
        %501 = vmatprep.subr.bf16.mxu0 0
        %502 = vmatpush2.bf16.msra.mxu0 0
        %503 = vmatprep.subr.bf16.mxu0 0
        %504 = vmatpush2.bf16.msra.mxu0 0
        %505 = vmatprep.subr.bf16.mxu0 0
        %506 = vmatpush2.bf16.msra.mxu0 0
        %507 = vmatprep.subr.bf16.mxu0 0
        %508 = vmatpush2.bf16.msra.mxu0 0
        %509 = vmatprep.subr.bf16.mxu0 0
        %510 = vmatpush2.bf16.msra.mxu0 0
        %511 = vmatprep.subr.bf16.mxu0 0
        %512 = vmatpush2.bf16.msra.mxu0 0
        %513 = vmatprep.subr.bf16.mxu0 0
        %514 = vmatpush2.bf16.msra.mxu0 0
        %515 = vmatprep.subr.bf16.mxu0 0
        %516 = vmatpush2.bf16.msra.mxu0 0
        %517 = vmatprep.mubr.bf16.mxu0 0
        %518 = vmatmul.mubr.bf16.gmra.mxu0 %v470
        %v519 = vpop.f32.mrf.mxu0
        %v520 = vadd.f32 %v398, %v519
        %v521 = vpop.f32.mrf.mxu0
        %v522 = vadd.f32 %v398, %v521
        %v523 = vpop.f32.mrf.mxu0
        %v524 = vadd.f32 %v403, %v523
        %v525 = vpop.f32.mrf.mxu0
        %v526 = vadd.f32 %v403, %v525
        %527 = vmatprep.mubr.bf16.mxu0 0
        %528 = vmatmul.mubr.bf16.gmra.mxu0 %v473
        %v529 = vpop.f32.mrf.mxu0
        %v530 = vadd.f32 %v408, %v529
        %v531 = vpop.f32.mrf.mxu0
        %v532 = vadd.f32 %v408, %v531
        %v533 = vpop.f32.mrf.mxu0
        %v534 = vadd.f32 %v413, %v533
        %v535 = vpop.f32.mrf.mxu0
        %v536 = vadd.f32 %v413, %v535
        %537 = vmatprep.mubr.bf16.mxu0 0
        %538 = vmatmul.mubr.bf16.gmra.mxu0 %v476
        %v539 = vpop.f32.mrf.mxu0
        %v540 = vadd.f32 %v418, %v539
        %v541 = vpop.f32.mrf.mxu0
        %v542 = vadd.f32 %v418, %v541
        %v543 = vpop.f32.mrf.mxu0
        %v544 = vpop.f32.mrf.mxu0
        %545 = vdwg.mxu0
        %v546 = vmax.f32 %v520, 0.0
        %v547 = vmax.f32 %v522, 0.0
        %v548 = vmax.f32 %v524, 0.0
        %v549 = vmax.f32 %v526, 0.0
        %v550 = vmax.f32 %v530, 0.0
        %v551 = vmax.f32 %v532, 0.0
        %v552 = vmax.f32 %v534, 0.0
        %v553 = vmax.f32 %v536, 0.0
        %v554 = vmax.f32 %v540, 0.0
        %v555 = vmax.f32 %v542, 0.0
        %v556 = vld [vmem:[%s364] sm:$0xff]
        %v557 = vld [vmem:[%s364 + $0x8] sm:$0xff]
        %v558 = vld [vmem:[%s364 + $0x10] sm:$0x1]
        %v559 = vld [vmem:[%s364 + $0x18] sm:$0x1]
        %v560 = vlaneseq
        %v561 = vshrl.u32 %v560, 7
        %v562 = vsub.s32 0, %v561
        %v563 = vrot.slane %v556, %v562
        %v564 = vlaneseq
        %v565 = vshrl.u32 %v564, 7
        %v566 = vsub.s32 0, %v565
        %v567 = vrot.slane %v557, %v566
        %v568 = vmul.f32 %v546, %v563
        %v569 = vmul.f32 %v547, %v567
        %vm570 = vcmask 1043456
        %v571 = vsel %vm570, %v546, 0.0
        %v572 = vrot.slane %v571, 4
        %v573 = vadd.f32 %v571, %v572
        %v574 = vrot.slane %v573, 2
        %v575 = vadd.f32 %v573, %v574
        %v576 = vrot.slane %v575, 1
        %v577 = vadd.f32 %v575, %v576
        %v578 = vsel %vm570, %v547, 0.0
        %v579 = vrot.slane %v578, 4
        %v580 = vadd.f32 %v578, %v579
        %v581 = vrot.slane %v580, 2
        %v582 = vadd.f32 %v580, %v581
        %v583 = vrot.slane %v582, 1
        %v584 = vadd.f32 %v582, %v583
        %v585 = vlaneseq
        %v586 = vshrl.u32 %v585, 7
        %v587 = vsub.s32 1, %v586
        %v588 = vrot.slane %v556, %v587
        %v589 = vlaneseq
        %v590 = vshrl.u32 %v589, 7
        %v591 = vsub.s32 1, %v590
        %v592 = vrot.slane %v557, %v591
        %v593 = vmul.f32 %v546, %v588
        %v594 = vmul.f32 %v547, %v592
        %v597 = vrot.slane %v546, 4
        %v598 = vrot.slane %v547, 4
        %v601 = vsel %vm570, %v597, 0.0
        %v602 = vrot.slane %v601, 4
        %v603 = vadd.f32 %v601, %v602
        %v604 = vrot.slane %v603, 2
        %v605 = vadd.f32 %v603, %v604
        %v606 = vrot.slane %v605, 1
        %v607 = vadd.f32 %v605, %v606
        %v608 = vsel %vm570, %v598, 0.0
        %v609 = vrot.slane %v608, 4
        %v610 = vadd.f32 %v608, %v609
        %v611 = vrot.slane %v610, 2
        %v612 = vadd.f32 %v610, %v611
        %v613 = vrot.slane %v612, 1
        %v614 = vadd.f32 %v612, %v613
        %v615 = vlaneseq
        %v616 = vshrl.u32 %v615, 7
        %v617 = vsub.s32 2, %v616
        %v618 = vrot.slane %v556, %v617
        %v619 = vlaneseq
        %v620 = vshrl.u32 %v619, 7
        %v621 = vsub.s32 2, %v620
        %v622 = vrot.slane %v557, %v621
        %v623 = vmul.f32 %v548, %v618
        %v624 = vmul.f32 %v549, %v622
        %v625 = vsel %vm570, %v548, 0.0
        %v626 = vrot.slane %v625, 4
        %v627 = vadd.f32 %v625, %v626
        %v628 = vrot.slane %v627, 2
        %v629 = vadd.f32 %v627, %v628
        %v630 = vrot.slane %v629, 1
        %v631 = vadd.f32 %v629, %v630
        %v632 = vsel %vm570, %v549, 0.0
        %v633 = vrot.slane %v632, 4
        %v634 = vadd.f32 %v632, %v633
        %v635 = vrot.slane %v634, 2
        %v636 = vadd.f32 %v634, %v635
        %v637 = vrot.slane %v636, 1
        %v638 = vadd.f32 %v636, %v637
        %v639 = vlaneseq
        %v640 = vshrl.u32 %v639, 7
        %v641 = vsub.s32 3, %v640
        %v642 = vrot.slane %v556, %v641
        %v643 = vlaneseq
        %v644 = vshrl.u32 %v643, 7
        %v645 = vsub.s32 3, %v644
        %v646 = vrot.slane %v557, %v645
        %v647 = vmul.f32 %v548, %v642
        %v648 = vmul.f32 %v549, %v646
        %v651 = vrot.slane %v548, 4
        %v652 = vrot.slane %v549, 4
        %v655 = vsel %vm570, %v651, 0.0
        %v656 = vrot.slane %v655, 4
        %v657 = vadd.f32 %v655, %v656
        %v658 = vrot.slane %v657, 2
        %v659 = vadd.f32 %v657, %v658
        %v660 = vrot.slane %v659, 1
        %v661 = vadd.f32 %v659, %v660
        %v662 = vsel %vm570, %v652, 0.0
        %v663 = vrot.slane %v662, 4
        %v664 = vadd.f32 %v662, %v663
        %v665 = vrot.slane %v664, 2
        %v666 = vadd.f32 %v664, %v665
        %v667 = vrot.slane %v666, 1
        %v668 = vadd.f32 %v666, %v667
        %v669 = vlaneseq
        %v670 = vshrl.u32 %v669, 7
        %v671 = vsub.s32 4, %v670
        %v672 = vrot.slane %v556, %v671
        %v673 = vlaneseq
        %v674 = vshrl.u32 %v673, 7
        %v675 = vsub.s32 4, %v674
        %v676 = vrot.slane %v557, %v675
        %v677 = vmul.f32 %v550, %v672
        %v678 = vmul.f32 %v551, %v676
        %v679 = vsel %vm570, %v550, 0.0
        %v680 = vrot.slane %v679, 4
        %v681 = vadd.f32 %v679, %v680
        %v682 = vrot.slane %v681, 2
        %v683 = vadd.f32 %v681, %v682
        %v684 = vrot.slane %v683, 1
        %v685 = vadd.f32 %v683, %v684
        %v686 = vsel %vm570, %v551, 0.0
        %v687 = vrot.slane %v686, 4
        %v688 = vadd.f32 %v686, %v687
        %v689 = vrot.slane %v688, 2
        %v690 = vadd.f32 %v688, %v689
        %v691 = vrot.slane %v690, 1
        %v692 = vadd.f32 %v690, %v691
        %v693 = vlaneseq
        %v694 = vshrl.u32 %v693, 7
        %v695 = vsub.s32 5, %v694
        %v696 = vrot.slane %v556, %v695
        %v697 = vlaneseq
        %v698 = vshrl.u32 %v697, 7
        %v699 = vsub.s32 5, %v698
        %v700 = vrot.slane %v557, %v699
        %v701 = vmul.f32 %v550, %v696
        %v702 = vmul.f32 %v551, %v700
        %v705 = vrot.slane %v550, 4
        %v706 = vrot.slane %v551, 4
        %v709 = vsel %vm570, %v705, 0.0
        %v710 = vrot.slane %v709, 4
        %v711 = vadd.f32 %v709, %v710
        %v712 = vrot.slane %v711, 2
        %v713 = vadd.f32 %v711, %v712
        %v714 = vrot.slane %v713, 1
        %v715 = vadd.f32 %v713, %v714
        %v716 = vsel %vm570, %v706, 0.0
        %v717 = vrot.slane %v716, 4
        %v718 = vadd.f32 %v716, %v717
        %v719 = vrot.slane %v718, 2
        %v720 = vadd.f32 %v718, %v719
        %v721 = vrot.slane %v720, 1
        %v722 = vadd.f32 %v720, %v721
        %v723 = vlaneseq
        %v724 = vshrl.u32 %v723, 7
        %v725 = vsub.s32 6, %v724
        %v726 = vrot.slane %v556, %v725
        %v727 = vlaneseq
        %v728 = vshrl.u32 %v727, 7
        %v729 = vsub.s32 6, %v728
        %v730 = vrot.slane %v557, %v729
        %v731 = vmul.f32 %v552, %v726
        %v732 = vmul.f32 %v553, %v730
        %v733 = vsel %vm570, %v552, 0.0
        %v734 = vrot.slane %v733, 4
        %v735 = vadd.f32 %v733, %v734
        %v736 = vrot.slane %v735, 2
        %v737 = vadd.f32 %v735, %v736
        %v738 = vrot.slane %v737, 1
        %v739 = vadd.f32 %v737, %v738
        %v740 = vsel %vm570, %v553, 0.0
        %v741 = vrot.slane %v740, 4
        %v742 = vadd.f32 %v740, %v741
        %v743 = vrot.slane %v742, 2
        %v744 = vadd.f32 %v742, %v743
        %v745 = vrot.slane %v744, 1
        %v746 = vadd.f32 %v744, %v745
        %v747 = vlaneseq
        %v748 = vshrl.u32 %v747, 7
        %v749 = vsub.s32 7, %v748
        %v750 = vrot.slane %v556, %v749
        %v751 = vlaneseq
        %v752 = vshrl.u32 %v751, 7
        %v753 = vsub.s32 7, %v752
        %v754 = vrot.slane %v557, %v753
        %v755 = vmul.f32 %v552, %v750
        %v756 = vmul.f32 %v553, %v754
        %v759 = vrot.slane %v552, 4
        %v760 = vrot.slane %v553, 4
        %v763 = vsel %vm570, %v759, 0.0
        %v764 = vrot.slane %v763, 4
        %v765 = vadd.f32 %v763, %v764
        %v766 = vrot.slane %v765, 2
        %v767 = vadd.f32 %v765, %v766
        %v768 = vrot.slane %v767, 1
        %v769 = vadd.f32 %v767, %v768
        %v770 = vsel %vm570, %v760, 0.0
        %v771 = vrot.slane %v770, 4
        %v772 = vadd.f32 %v770, %v771
        %v773 = vrot.slane %v772, 2
        %v774 = vadd.f32 %v772, %v773
        %v775 = vrot.slane %v774, 1
        %v776 = vadd.f32 %v774, %v775
        %v777 = vlaneseq
        %v778 = vshrl.u32 %v777, 7
        %v779 = vsub.s32 0, %v778
        %v780 = vrot.slane %v558, %v779
        %v781 = vlaneseq
        %v782 = vshrl.u32 %v781, 7
        %v783 = vsub.s32 0, %v782
        %v784 = vrot.slane %v559, %v783
        %v785 = vmul.f32 %v554, %v780
        %v786 = vmul.f32 %v555, %v784
        %v787 = vsel %vm570, %v554, 0.0
        %v788 = vrot.slane %v787, 4
        %v789 = vadd.f32 %v787, %v788
        %v790 = vrot.slane %v789, 2
        %v791 = vadd.f32 %v789, %v790
        %v792 = vrot.slane %v791, 1
        %v793 = vadd.f32 %v791, %v792
        %v794 = vsel %vm570, %v555, 0.0
        %v795 = vrot.slane %v794, 4
        %v796 = vadd.f32 %v794, %v795
        %v797 = vrot.slane %v796, 2
        %v798 = vadd.f32 %v796, %v797
        %v799 = vrot.slane %v798, 1
        %v800 = vadd.f32 %v798, %v799
        %v803 = vrot.slane %v593, 4
        %v804 = vrot.slane %v594, 4
        %v807 = vadd.f32 %v568, %v803
        %v808 = vadd.f32 %v569, %v804
        %v811 = vrot.slane %v647, 4
        %v812 = vrot.slane %v648, 4
        %v815 = vadd.f32 %v623, %v811
        %v816 = vadd.f32 %v624, %v812
        %v819 = vrot.slane %v701, 4
        %v820 = vrot.slane %v702, 4
        %v823 = vadd.f32 %v677, %v819
        %v824 = vadd.f32 %v678, %v820
        %v827 = vrot.slane %v755, 4
        %v828 = vrot.slane %v756, 4
        %v831 = vadd.f32 %v731, %v827
        %v832 = vadd.f32 %v732, %v828
        %v833 = vadd.f32 %v807, %v815
        %v834 = vadd.f32 %v808, %v816
        %v835 = vadd.f32 %v823, %v831
        %v836 = vadd.f32 %v824, %v832
        %v837 = vadd.f32 %v833, %v835
        %v838 = vadd.f32 %v834, %v836
        %v839 = vadd.f32 %v837, %v785
        %v840 = vadd.f32 %v838, %v786
        %v841 = vld [vmem:[%s354] sm:$0xff]
        %v844 = vcombine.low %v839, %v840
        %v846 = vadd.f32 %v841, %v844
        %847 = vst [vmem:[%s324] sm:$0xff] %v846
        %vm848 = vcmask 1040384
        %v849 = vsel %vm848, %v577, %v607
        %v850 = vsel %vm848, %v584, %v614
        %vm851 = vcmask 1041408
        %v852 = vsel %vm851, %v849, %v631
        %v853 = vsel %vm851, %v850, %v638
        %v854 = vsel %vm478, %v852, %v661
        %v855 = vsel %vm478, %v853, %v668
        %v856 = vsel %vm570, %v854, %v685
        %v857 = vsel %vm570, %v855, %v692
        %vm858 = vcmask 1044480
        %v859 = vsel %vm858, %v856, %v715
        %v860 = vsel %vm858, %v857, %v722
        %vm861 = vcmask 1045504
        %v862 = vsel %vm861, %v859, %v739
        %v863 = vsel %vm861, %v860, %v746
        %vm864 = vcmask 1046528
        %v865 = vsel %vm864, %v862, %v769
        %v866 = vsel %vm864, %v863, %v776
        %v867 = vmul.f32 %v865, 0.25
        %v868 = vmul.f32 %v866, 0.25
        %v869 = vmul.f32 %v793, 0.25
        %v870 = vmul.f32 %v800, 0.25
        %871 = vst [vmem:[%s375] sm:$0xff] %v867
        %872 = vst [vmem:[%s375 + $0x8] sm:$0xff] %v868
        %873 = vst [vmem:[%s375 + $0x10] sm:$0x1] %v869
        %874 = vst [vmem:[%s375 + $0x18] sm:$0x1] %v870
        %s875 = sand.u32 %s169, 1
        %s876 = scalar_lea.sflag [#allocation3], %s875
        %s877 = sand.u32 %s169, 1
        %s878 = smul.addr %s877, 8
        %s879 = scalar_lea.vmem [#allocation2], %s878
        %s880 = smul.u32 2, %s26
        %p881 = scmp.lt.s32.totalorder %s25, 1
        %s882 = scalar_select %p881, %s25, 1
        %p883 = scmp.lt.s32.totalorder %s880, 1
        %s884 = scalar_select %p883, %s880, 1
        %s885 = smul.addr %s882, 4
        %s886 = sadd.s32 %s884, %s885
        %s887 = smul.addr %s886, 8
        %s888 = scalar_lea.vmem %s6, %s887
        // Predicated region
        $region41: #{tpu_custom_call.1} parent=39 // pred_check
          %p889 = pneg %p179
        $region42: #{tpu_custom_call.1} parent=39 // pred_check_branch
          %891 = sbr.rel (%p889) target = $region44
        $region43: #{tpu_custom_call.1} parent=39 // pred_region
          %s892 = smul.u32 2, %s26
          %s894 = ssub.s32 128, 128
          %895 = vsyncadd %s876, %s894
          %s896 = smul.addr %s25, 2
          %s897 = sadd.s32 %s892, %s896
          %s898 = smul.addr %s897, 64
          %s899 = scalar_lea.hbm %s5, %s898
          %s901 = sshll.u32 %s879, 4
          %s902 = int_to_ptr.vmem [resolvable:$true] %s901
          %904 = dma.vmem_to_hbm [thread:$0]  %s902, 128, %s899, %s876
        $region44: #{tpu_custom_call.1} parent=39 // pred_fallthru
          _
        // Predicated region
        $region45: #{tpu_custom_call.1} parent=39 // pred_check
          %p905 = pneg %p207
        $region46: #{tpu_custom_call.1} parent=39 // pred_check_branch
          %907 = sbr.rel (%p905) target = $region48
        $region47: #{tpu_custom_call.1} parent=39 // pred_region
          %s908 = smul.u32 2, %s26
        $region48: #{tpu_custom_call.1} parent=39 // pred_fallthru
          _
      $region40: #{tpu_custom_call.1} parent=5 // pred_fallthru
        _
      %p909 = scmp.le.s32.totalorder 2, %s16
      // Predicated region
      $region49: #{tpu_custom_call.1} parent=5 // pred_check
        %p910 = pneg %p909
      $region50: #{tpu_custom_call.1} parent=5 // pred_check_branch
        %912 = sbr.rel (%p910) target = $region52
      $region51: #{tpu_custom_call.1} parent=5 // pred_region
        %s913 = ssub.s32 %s16, 2
        // Predicated region
        $region53: #{tpu_custom_call.1} parent=51 // pred_check
          %p914 = pneg %p185
        $region54: #{tpu_custom_call.1} parent=51 // pred_check_branch
          %916 = sbr.rel (%p914) target = $region56
        $region55: #{tpu_custom_call.1} parent=51 // pred_region
          %s917 = sand.u32 %s170, 1
          %s918 = scalar_lea.sflag [#allocation3], %s917
          %s919 = sand.u32 %s170, 1
          %s920 = smul.addr %s919, 8
          %s921 = scalar_lea.vmem [#allocation2], %s920
          %922 = dma.done %s918, 128
        $region56: #{tpu_custom_call.1} parent=51 // pred_fallthru
          _
        // Predicated region
        $region57: #{tpu_custom_call.1} parent=51 // pred_check
          %p923 = pneg %p213
        $region58: #{tpu_custom_call.1} parent=51 // pred_check_branch
          %925 = sbr.rel (%p923) target = $region60
        $region59: #{tpu_custom_call.1} parent=51 // pred_region
          %s926 = smul.u32 2, %s28
          %p927 = scmp.lt.s32.totalorder %s27, 1
          %s928 = scalar_select %p927, %s27, 1
          %p929 = scmp.lt.s32.totalorder %s926, 1
          %s930 = scalar_select %p929, %s926, 1
          %s931 = smul.addr %s928, 4
          %s932 = sadd.s32 %s930, %s931
          %s933 = smul.addr %s932, 8
          %s934 = scalar_lea.vmem %s6, %s933
        $region60: #{tpu_custom_call.1} parent=51 // pred_fallthru
          _
      $region52: #{tpu_custom_call.1} parent=5 // pred_fallthru
        _
    $region6: #{tpu_custom_call.1} parent=1 // loop_footer
      %s20 = sadd.s32 1, %s16
    $region7: #{tpu_custom_call.1} parent=1 // loop_footer_branch
      %15 = sbr.rel target = $region3
    $region8: #{tpu_custom_call.1} parent=1 // loop_exit
      _
    %935 = vsyncpa [#allocation3], 1
    %s936 = scalar_lea.sflag [#allocation3], 1
    %937 = vsyncpa %s936, 1

</llo_original>
